<compile_context>
chip_gen: v5e
topology: v5e:2x2
jax: 0.10.0
libtpu: 0.0.40
codegen_flags: <defaults>
</compile_context>

<pallas_src>
import jax
import jax.numpy as jnp
import numpy as np
from jax.experimental import pallas as pl
from jax.experimental.pallas import tpu as pltpu

EPS = 1e-5


def _stage_lengths(L0, kslist, poollist):
    """Per-stage (conv_out_len, pool_out_len) with PyTorch valid/floor rules."""
    lens, L = [], L0
    for ks, pool in zip(kslist, poollist):
        Lc = L - ks + 1          # Conv1d, no padding, stride 1
        Lp = Lc // pool          # MaxPool1d, stride == kernel, floor
        lens.append((Lc, Lp))
        L = Lp
    return lens


def make_cnn1d_kernel(N, L0, chlist, kslist, poollist):
    n_stages = len(kslist)
    lens = _stage_lengths(L0, kslist, poollist)

    def kernel(*refs):
        x_ref = refs[0]
        conv_refs = refs[1:1 + 3 * n_stages]
        wf1_ref, bf1_ref, wf2_ref, bf2_ref = refs[1 + 3 * n_stages:5 + 3 * n_stages]
        out_ref = refs[5 + 3 * n_stages]

        x = x_ref[...]                                        # (N*L0, C0) f32
        # per-sample 2-D activations: rows = length, lanes = channels
        hs = [x[n * L0:(n + 1) * L0, :] for n in range(N)]

        for i in range(n_stages):
            ks, pool = kslist[i], poollist[i]
            Cout = chlist[i + 1]
            Lc, Lp = lens[i]
            w_ref = conv_refs[3 * i]
            g_ref = conv_refs[3 * i + 1]
            b_ref = conv_refs[3 * i + 2]

            # ---- Conv1d as ONE im2col matmul: (N*Lc, ks*Cin) @ (ks*Cin, Cout) ----
            patches = jnp.concatenate(
                [jnp.concatenate([hs[n][k:k + Lc, :] for k in range(ks)], axis=-1)
                 for n in range(N)], axis=0)                   # (N*Lc, ks*Cin) f32
            conv = jnp.dot(patches.astype(jnp.bfloat16),
                           w_ref[...].astype(jnp.bfloat16),
                           preferred_element_type=jnp.float32)  # (N*Lc, Cout) f32

            # ---- BatchNorm1d (training-mode batch stats), one-pass + fused affine ----
            m = float(N * Lc)
            s = jnp.sum(conv, axis=0, keepdims=True)
            ss = jnp.sum(conv * conv, axis=0, keepdims=True)
            mean = s * (1.0 / m)
            var = jnp.maximum(ss * (1.0 / m) - mean * mean, 0.0)   # biased variance
            scale = g_ref[...] * jax.lax.rsqrt(var + EPS)          # (1, Cout)
            shift = b_ref[...] - mean * scale
            act = jnp.maximum(conv * scale + shift, 0.0)           # BN + ReLU, f32

            # ---- MaxPool1d(pool): per sample, contiguous static slices only ----
            new_hs = []
            for n in range(N):
                a = act[n * Lc:(n + 1) * Lc, :]                    # (Lc, Cout)
                rows = [jnp.max(a[t * pool:(t + 1) * pool, :], axis=0, keepdims=True)
                        for t in range(Lp)]
                new_hs.append(jnp.concatenate(rows, axis=0))       # (Lp, Cout)
            hs = new_hs

        # ---- Flatten (NLC order; fc1 weight was pre-permuted in the wrapper) ----
        Lf = lens[-1][1]
        flat = jnp.concatenate(
            [jnp.concatenate([hs[n][l:l + 1, :] for l in range(Lf)], axis=-1)
             for n in range(N)], axis=0)                           # (N, Lf*Cf)

        # ---- Dropout(identity) -> fc1 -> ReLU -> Dropout(identity) -> fc2 -> Sigmoid ----
        h1 = jnp.dot(flat.astype(jnp.bfloat16), wf1_ref[...].astype(jnp.bfloat16),
                     preferred_element_type=jnp.float32) + bf1_ref[...]
        h1 = jnp.maximum(h1, 0.0)
        logits = jnp.dot(h1.astype(jnp.bfloat16), wf2_ref[...].astype(jnp.bfloat16),
                         preferred_element_type=jnp.float32) + bf2_ref[...]
        out_ref[...] = 1.0 / (1.0 + jnp.exp(-logits))              # sigmoid (== torch.sigmoid)

    return kernel


def cnn1d_sigmoidout_pallas(x_ncl, params, chlist, kslist, poollist, hidden, classes):
    N, C0, L0 = x_ncl.shape
    assert C0 == chlist[0]
    lens = _stage_lengths(L0, kslist, poollist)
    Lf, Cf = lens[-1][1], chlist[-1]

    kernel = make_cnn1d_kernel(N, L0, chlist, kslist, poollist)

    # Wrapper-side layout plumbing (free): (N, C, L) -> (N*L, C), channels on lanes.
    x2d = jnp.transpose(x_ncl, (0, 2, 1)).reshape(N * L0, C0).astype(jnp.float32)
    # fc1 weight rows are in PyTorch flatten order (c*Lf + l); permute to the
    # kernel's NLC flatten order (l*Cf + c) so the kernel needs no transpose.
    w_fc1_nlc = jnp.transpose(
        params["w_fc1"].reshape(Cf, Lf, hidden), (1, 0, 2)).reshape(Lf * Cf, hidden)

    args = [x2d]
    for i in range(len(kslist)):
        args += [params[f"w{i}"], params[f"g{i}"], params[f"b{i}"]]
    args += [w_fc1_nlc, params["b_fc1"], params["w_fc2"], params["b_fc2"]]

    return pl.pallas_call(
        kernel,
        out_shape=jax.ShapeDtypeStruct((N, classes), jnp.float32),
        in_specs=[pl.BlockSpec(memory_space=pltpu.MemorySpace.VMEM)] * len(args),
        out_specs=pl.BlockSpec(memory_space=pltpu.MemorySpace.VMEM),
    )(*args)


def init_params(key, chlist, kslist, poollist, L0, hidden, classes):
    """Deterministic synthetic weights, stored matmul-ready."""
    n = len(kslist)
    lens = _stage_lengths(L0, kslist, poollist)
    flat_dim = chlist[-1] * lens[-1][1]
    keys = jax.random.split(key, 3 * n + 4)
    p = {}
    for i in range(n):
        ks, Cin, Cout = kslist[i], chlist[i], chlist[i + 1]
        # Conv1d weight (Cout, Cin, ks) stored matmul-ready as (ks*Cin, Cout)
        p[f"w{i}"] = jax.random.normal(keys[3 * i], (ks * Cin, Cout),
                                       jnp.float32) / np.sqrt(ks * Cin)
        p[f"g{i}"] = 1.0 + 0.1 * jax.random.normal(keys[3 * i + 1], (1, Cout), jnp.float32)
        p[f"b{i}"] = 0.1 * jax.random.normal(keys[3 * i + 2], (1, Cout), jnp.float32)
    p["w_fc1"] = jax.random.normal(keys[3 * n], (flat_dim, hidden),
                                   jnp.float32) / np.sqrt(flat_dim)
    p["b_fc1"] = 0.1 * jax.random.normal(keys[3 * n + 1], (1, hidden), jnp.float32)
    p["w_fc2"] = jax.random.normal(keys[3 * n + 2], (hidden, classes),
                                   jnp.float32) / np.sqrt(hidden)
    p["b_fc2"] = 0.1 * jax.random.normal(keys[3 * n + 3], (1, classes), jnp.float32)
    return p


def cnn1d_sigmoidout_ref(x_ncl, params, chlist, kslist, poollist, hidden, classes):
    """Pure-JAX reference (XLA conv / reduce_window) with identical semantics."""
    h = jnp.transpose(x_ncl, (0, 2, 1)).astype(jnp.float32)        # (N, L, C)
    for i, (ks, pool) in enumerate(zip(kslist, poollist)):
        Cin, Cout = chlist[i], chlist[i + 1]
        w = params[f"w{i}"].reshape(ks, Cin, Cout)                 # WIO
        conv = jax.lax.conv_general_dilated(
            h.astype(jnp.bfloat16), w.astype(jnp.bfloat16),
            window_strides=(1,), padding="VALID",
            dimension_numbers=("NWC", "WIO", "NWC"),
            preferred_element_type=jnp.float32)
        mean = conv.mean(axis=(0, 1), keepdims=True)
        var = ((conv - mean) ** 2).mean(axis=(0, 1), keepdims=True)    # biased
        bn = (conv - mean) * jax.lax.rsqrt(var + EPS) * params[f"g{i}"].reshape(1, 1, -1) \
            + params[f"b{i}"].reshape(1, 1, -1)
        act = jnp.maximum(bn, 0.0)
        h = jax.lax.reduce_window(act, -jnp.inf, jax.lax.max,
                                  (1, pool, 1), (1, pool, 1), "VALID")
    N = h.shape[0]
    flat = jnp.transpose(h, (0, 2, 1)).reshape(N, -1)              # PyTorch flatten (N, C*L)
    h1 = jnp.dot(flat.astype(jnp.bfloat16), params["w_fc1"].astype(jnp.bfloat16),
                 preferred_element_type=jnp.float32) + params["b_fc1"]
    h1 = jnp.maximum(h1, 0.0)
    logits = jnp.dot(h1.astype(jnp.bfloat16), params["w_fc2"].astype(jnp.bfloat16),
                     preferred_element_type=jnp.float32) + params["b_fc2"]
    return 1.0 / (1.0 + jnp.exp(-logits))


if __name__ == "__main__":
    key = jax.random.PRNGKey(0)
    kx, kp = jax.random.split(key)

    # Small shapes consistent with the module:
    # batch=2, chlist=[4, 8, 16], ksize=[3, 3], pool=[2, 2], L=32,
    # linear2_in=32, classes=3, drop=0.5 (identity in this deterministic forward).
    N, L0 = 2, 32
    chlist = [4, 8, 16]
    kslist = [3, 3]
    poollist = [2, 2]
    hidden = 32       # linear2_in
    classes = 3

    x = jax.random.normal(kx, (N, chlist[0], L0), jnp.float32)     # (N, C, L) like PyTorch
    params = init_params(kp, chlist, kslist, poollist, L0, hidden, classes)

    out = jax.block_until_ready(
        cnn1d_sigmoidout_pallas(x, params, chlist, kslist, poollist, hidden, classes))
    ref = jax.block_until_ready(
        cnn1d_sigmoidout_ref(x, params, chlist, kslist, poollist, hidden, classes))
    np.testing.assert_allclose(np.asarray(out), np.asarray(ref), rtol=2e-3, atol=2e-3)
    print("KERNEL_OK")
</pallas_src>

<mosaic_0001>
module attributes {stable_mosaic.version = 11 : i64} {
  func.func @kernel(%arg0: memref<64x4xf32, #tpu.memory_space<vmem>>, %arg1: memref<12x8xf32, #tpu.memory_space<vmem>>, %arg2: memref<1x8xf32, #tpu.memory_space<vmem>>, %arg3: memref<1x8xf32, #tpu.memory_space<vmem>>, %arg4: memref<24x16xf32, #tpu.memory_space<vmem>>, %arg5: memref<1x16xf32, #tpu.memory_space<vmem>>, %arg6: memref<1x16xf32, #tpu.memory_space<vmem>>, %arg7: memref<96x32xf32, #tpu.memory_space<vmem>>, %arg8: memref<1x32xf32, #tpu.memory_space<vmem>>, %arg9: memref<32x3xf32, #tpu.memory_space<vmem>>, %arg10: memref<1x3xf32, #tpu.memory_space<vmem>>, %arg11: memref<2x3xf32, #tpu.memory_space<vmem>>) attributes {dimension_semantics = [], scalar_prefetch = 0 : i64, scratch_operands = 0 : i64, tpu.core_type = #tpu.core_type<tc>} {
    %c0 = arith.constant 0 : index
    %c0_0 = arith.constant 0 : index
    %0 = vector.load %arg0[%c0, %c0_0] : memref<64x4xf32, #tpu.memory_space<vmem>>, vector<64x4xf32>
    %1 = vector.extract_strided_slice %0 {offsets = [0, 0], sizes = [32, 4], strides = [1, 1]} : vector<64x4xf32> to vector<32x4xf32>
    %2 = vector.extract_strided_slice %0 {offsets = [32, 0], sizes = [32, 4], strides = [1, 1]} : vector<64x4xf32> to vector<32x4xf32>
    %3 = vector.extract_strided_slice %1 {offsets = [0, 0], sizes = [30, 4], strides = [1, 1]} : vector<32x4xf32> to vector<30x4xf32>
    %4 = vector.extract_strided_slice %1 {offsets = [1, 0], sizes = [30, 4], strides = [1, 1]} : vector<32x4xf32> to vector<30x4xf32>
    %5 = vector.extract_strided_slice %1 {offsets = [2, 0], sizes = [30, 4], strides = [1, 1]} : vector<32x4xf32> to vector<30x4xf32>
    %6 = tpu.concatenate %3, %4, %5 in 1 : vector<30x4xf32>, vector<30x4xf32>, vector<30x4xf32> -> vector<30x12xf32>
    %7 = vector.extract_strided_slice %2 {offsets = [0, 0], sizes = [30, 4], strides = [1, 1]} : vector<32x4xf32> to vector<30x4xf32>
    %8 = vector.extract_strided_slice %2 {offsets = [1, 0], sizes = [30, 4], strides = [1, 1]} : vector<32x4xf32> to vector<30x4xf32>
    %9 = vector.extract_strided_slice %2 {offsets = [2, 0], sizes = [30, 4], strides = [1, 1]} : vector<32x4xf32> to vector<30x4xf32>
    %10 = tpu.concatenate %7, %8, %9 in 1 : vector<30x4xf32>, vector<30x4xf32>, vector<30x4xf32> -> vector<30x12xf32>
    %11 = tpu.concatenate %6, %10 in 0 : vector<30x12xf32>, vector<30x12xf32> -> vector<60x12xf32>
    %12 = arith.truncf %11 : vector<60x12xf32> to vector<60x12xbf16>
    %c0_1 = arith.constant 0 : index
    %c0_2 = arith.constant 0 : index
    %13 = vector.load %arg1[%c0_1, %c0_2] : memref<12x8xf32, #tpu.memory_space<vmem>>, vector<12x8xf32>
    %14 = arith.truncf %13 : vector<12x8xf32> to vector<12x8xbf16>
    %cst = arith.constant dense<0.000000e+00> : vector<60x8xf32>
    %15 = tpu.matmul %12, %14, %cst {dimension_numbers = #tpu.dot_dimension_numbers<[1], [0], [0], [1], [0, 0, 1, 1], [], []>} : vector<60x12xbf16>, vector<12x8xbf16>, vector<60x8xf32> -> vector<60x8xf32>
    %cst_3 = arith.constant dense<0.000000e+00> : vector<8xf32>
    %16 = vector.multi_reduction <add>, %15, %cst_3 [0] : vector<60x8xf32> to vector<8xf32>
    %17 = vector.shape_cast %16 : vector<8xf32> to vector<1x8xf32>
    %18 = arith.mulf %15, %15 : vector<60x8xf32>
    %cst_4 = arith.constant dense<0.000000e+00> : vector<8xf32>
    %19 = vector.multi_reduction <add>, %18, %cst_4 [0] : vector<60x8xf32> to vector<8xf32>
    %20 = vector.shape_cast %19 : vector<8xf32> to vector<1x8xf32>
    %cst_5 = arith.constant 0.0166666675 : f32
    %21 = vector.broadcast %cst_5 : f32 to vector<1x8xf32>
    %22 = arith.mulf %17, %21 : vector<1x8xf32>
    %cst_6 = arith.constant 0.0166666675 : f32
    %23 = vector.broadcast %cst_6 : f32 to vector<1x8xf32>
    %24 = arith.mulf %20, %23 : vector<1x8xf32>
    %25 = arith.mulf %22, %22 : vector<1x8xf32>
    %26 = arith.subf %24, %25 : vector<1x8xf32>
    %cst_7 = arith.constant 0.000000e+00 : f32
    %27 = vector.broadcast %cst_7 : f32 to vector<1x8xf32>
    %28 = arith.maximumf %26, %27 : vector<1x8xf32>
    %c0_8 = arith.constant 0 : index
    %c0_9 = arith.constant 0 : index
    %29 = vector.load %arg2[%c0_8, %c0_9] : memref<1x8xf32, #tpu.memory_space<vmem>>, vector<1x8xf32>
    %cst_10 = arith.constant 9.99999974E-6 : f32
    %30 = vector.broadcast %cst_10 : f32 to vector<1x8xf32>
    %31 = arith.addf %28, %30 : vector<1x8xf32>
    %32 = math.rsqrt %31 : vector<1x8xf32>
    %33 = arith.mulf %29, %32 : vector<1x8xf32>
    %c0_11 = arith.constant 0 : index
    %c0_12 = arith.constant 0 : index
    %34 = vector.load %arg3[%c0_11, %c0_12] : memref<1x8xf32, #tpu.memory_space<vmem>>, vector<1x8xf32>
    %35 = arith.mulf %22, %33 : vector<1x8xf32>
    %36 = arith.subf %34, %35 : vector<1x8xf32>
    %37 = vector.broadcast %33 : vector<1x8xf32> to vector<60x8xf32>
    %38 = arith.mulf %15, %37 : vector<60x8xf32>
    %39 = vector.broadcast %36 : vector<1x8xf32> to vector<60x8xf32>
    %40 = arith.addf %38, %39 : vector<60x8xf32>
    %cst_13 = arith.constant 0.000000e+00 : f32
    %41 = vector.broadcast %cst_13 : f32 to vector<60x8xf32>
    %42 = arith.maximumf %40, %41 : vector<60x8xf32>
    %43 = vector.extract_strided_slice %42 {offsets = [0, 0], sizes = [30, 8], strides = [1, 1]} : vector<60x8xf32> to vector<30x8xf32>
    %44 = vector.extract_strided_slice %43 {offsets = [0, 0], sizes = [2, 8], strides = [1, 1]} : vector<30x8xf32> to vector<2x8xf32>
    %cst_14 = arith.constant dense<0xFF800000> : vector<8xf32>
    %45 = vector.multi_reduction <maximumf>, %44, %cst_14 [0] : vector<2x8xf32> to vector<8xf32>
    %46 = vector.shape_cast %45 : vector<8xf32> to vector<1x8xf32>
    %47 = vector.extract_strided_slice %43 {offsets = [2, 0], sizes = [2, 8], strides = [1, 1]} : vector<30x8xf32> to vector<2x8xf32>
    %cst_15 = arith.constant dense<0xFF800000> : vector<8xf32>
    %48 = vector.multi_reduction <maximumf>, %47, %cst_15 [0] : vector<2x8xf32> to vector<8xf32>
    %49 = vector.shape_cast %48 : vector<8xf32> to vector<1x8xf32>
    %50 = vector.extract_strided_slice %43 {offsets = [4, 0], sizes = [2, 8], strides = [1, 1]} : vector<30x8xf32> to vector<2x8xf32>
    %cst_16 = arith.constant dense<0xFF800000> : vector<8xf32>
    %51 = vector.multi_reduction <maximumf>, %50, %cst_16 [0] : vector<2x8xf32> to vector<8xf32>
    %52 = vector.shape_cast %51 : vector<8xf32> to vector<1x8xf32>
    %53 = vector.extract_strided_slice %43 {offsets = [6, 0], sizes = [2, 8], strides = [1, 1]} : vector<30x8xf32> to vector<2x8xf32>
    %cst_17 = arith.constant dense<0xFF800000> : vector<8xf32>
    %54 = vector.multi_reduction <maximumf>, %53, %cst_17 [0] : vector<2x8xf32> to vector<8xf32>
    %55 = vector.shape_cast %54 : vector<8xf32> to vector<1x8xf32>
    %56 = vector.extract_strided_slice %43 {offsets = [8, 0], sizes = [2, 8], strides = [1, 1]} : vector<30x8xf32> to vector<2x8xf32>
    %cst_18 = arith.constant dense<0xFF800000> : vector<8xf32>
    %57 = vector.multi_reduction <maximumf>, %56, %cst_18 [0] : vector<2x8xf32> to vector<8xf32>
    %58 = vector.shape_cast %57 : vector<8xf32> to vector<1x8xf32>
    %59 = vector.extract_strided_slice %43 {offsets = [10, 0], sizes = [2, 8], strides = [1, 1]} : vector<30x8xf32> to vector<2x8xf32>
    %cst_19 = arith.constant dense<0xFF800000> : vector<8xf32>
    %60 = vector.multi_reduction <maximumf>, %59, %cst_19 [0] : vector<2x8xf32> to vector<8xf32>
    %61 = vector.shape_cast %60 : vector<8xf32> to vector<1x8xf32>
    %62 = vector.extract_strided_slice %43 {offsets = [12, 0], sizes = [2, 8], strides = [1, 1]} : vector<30x8xf32> to vector<2x8xf32>
    %cst_20 = arith.constant dense<0xFF800000> : vector<8xf32>
    %63 = vector.multi_reduction <maximumf>, %62, %cst_20 [0] : vector<2x8xf32> to vector<8xf32>
    %64 = vector.shape_cast %63 : vector<8xf32> to vector<1x8xf32>
    %65 = vector.extract_strided_slice %43 {offsets = [14, 0], sizes = [2, 8], strides = [1, 1]} : vector<30x8xf32> to vector<2x8xf32>
    %cst_21 = arith.constant dense<0xFF800000> : vector<8xf32>
    %66 = vector.multi_reduction <maximumf>, %65, %cst_21 [0] : vector<2x8xf32> to vector<8xf32>
    %67 = vector.shape_cast %66 : vector<8xf32> to vector<1x8xf32>
    %68 = vector.extract_strided_slice %43 {offsets = [16, 0], sizes = [2, 8], strides = [1, 1]} : vector<30x8xf32> to vector<2x8xf32>
    %cst_22 = arith.constant dense<0xFF800000> : vector<8xf32>
    %69 = vector.multi_reduction <maximumf>, %68, %cst_22 [0] : vector<2x8xf32> to vector<8xf32>
    %70 = vector.shape_cast %69 : vector<8xf32> to vector<1x8xf32>
    %71 = vector.extract_strided_slice %43 {offsets = [18, 0], sizes = [2, 8], strides = [1, 1]} : vector<30x8xf32> to vector<2x8xf32>
    %cst_23 = arith.constant dense<0xFF800000> : vector<8xf32>
    %72 = vector.multi_reduction <maximumf>, %71, %cst_23 [0] : vector<2x8xf32> to vector<8xf32>
    %73 = vector.shape_cast %72 : vector<8xf32> to vector<1x8xf32>
    %74 = vector.extract_strided_slice %43 {offsets = [20, 0], sizes = [2, 8], strides = [1, 1]} : vector<30x8xf32> to vector<2x8xf32>
    %cst_24 = arith.constant dense<0xFF800000> : vector<8xf32>
    %75 = vector.multi_reduction <maximumf>, %74, %cst_24 [0] : vector<2x8xf32> to vector<8xf32>
    %76 = vector.shape_cast %75 : vector<8xf32> to vector<1x8xf32>
    %77 = vector.extract_strided_slice %43 {offsets = [22, 0], sizes = [2, 8], strides = [1, 1]} : vector<30x8xf32> to vector<2x8xf32>
    %cst_25 = arith.constant dense<0xFF800000> : vector<8xf32>
    %78 = vector.multi_reduction <maximumf>, %77, %cst_25 [0] : vector<2x8xf32> to vector<8xf32>
    %79 = vector.shape_cast %78 : vector<8xf32> to vector<1x8xf32>
    %80 = vector.extract_strided_slice %43 {offsets = [24, 0], sizes = [2, 8], strides = [1, 1]} : vector<30x8xf32> to vector<2x8xf32>
    %cst_26 = arith.constant dense<0xFF800000> : vector<8xf32>
    %81 = vector.multi_reduction <maximumf>, %80, %cst_26 [0] : vector<2x8xf32> to vector<8xf32>
    %82 = vector.shape_cast %81 : vector<8xf32> to vector<1x8xf32>
    %83 = vector.extract_strided_slice %43 {offsets = [26, 0], sizes = [2, 8], strides = [1, 1]} : vector<30x8xf32> to vector<2x8xf32>
    %cst_27 = arith.constant dense<0xFF800000> : vector<8xf32>
    %84 = vector.multi_reduction <maximumf>, %83, %cst_27 [0] : vector<2x8xf32> to vector<8xf32>
    %85 = vector.shape_cast %84 : vector<8xf32> to vector<1x8xf32>
    %86 = vector.extract_strided_slice %43 {offsets = [28, 0], sizes = [2, 8], strides = [1, 1]} : vector<30x8xf32> to vector<2x8xf32>
    %cst_28 = arith.constant dense<0xFF800000> : vector<8xf32>
    %87 = vector.multi_reduction <maximumf>, %86, %cst_28 [0] : vector<2x8xf32> to vector<8xf32>
    %88 = vector.shape_cast %87 : vector<8xf32> to vector<1x8xf32>
    %89 = tpu.concatenate %46, %49, %52, %55, %58, %61, %64, %67, %70, %73, %76, %79, %82, %85, %88 in 0 : vector<1x8xf32>, vector<1x8xf32>, vector<1x8xf32>, vector<1x8xf32>, vector<1x8xf32>, vector<1x8xf32>, vector<1x8xf32>, vector<1x8xf32>, vector<1x8xf32>, vector<1x8xf32>, vector<1x8xf32>, vector<1x8xf32>, vector<1x8xf32>, vector<1x8xf32>, vector<1x8xf32> -> vector<15x8xf32>
    %90 = vector.extract_strided_slice %42 {offsets = [30, 0], sizes = [30, 8], strides = [1, 1]} : vector<60x8xf32> to vector<30x8xf32>
    %91 = vector.extract_strided_slice %90 {offsets = [0, 0], sizes = [2, 8], strides = [1, 1]} : vector<30x8xf32> to vector<2x8xf32>
    %cst_29 = arith.constant dense<0xFF800000> : vector<8xf32>
    %92 = vector.multi_reduction <maximumf>, %91, %cst_29 [0] : vector<2x8xf32> to vector<8xf32>
    %93 = vector.shape_cast %92 : vector<8xf32> to vector<1x8xf32>
    %94 = vector.extract_strided_slice %90 {offsets = [2, 0], sizes = [2, 8], strides = [1, 1]} : vector<30x8xf32> to vector<2x8xf32>
    %cst_30 = arith.constant dense<0xFF800000> : vector<8xf32>
    %95 = vector.multi_reduction <maximumf>, %94, %cst_30 [0] : vector<2x8xf32> to vector<8xf32>
    %96 = vector.shape_cast %95 : vector<8xf32> to vector<1x8xf32>
    %97 = vector.extract_strided_slice %90 {offsets = [4, 0], sizes = [2, 8], strides = [1, 1]} : vector<30x8xf32> to vector<2x8xf32>
    %cst_31 = arith.constant dense<0xFF800000> : vector<8xf32>
    %98 = vector.multi_reduction <maximumf>, %97, %cst_31 [0] : vector<2x8xf32> to vector<8xf32>
    %99 = vector.shape_cast %98 : vector<8xf32> to vector<1x8xf32>
    %100 = vector.extract_strided_slice %90 {offsets = [6, 0], sizes = [2, 8], strides = [1, 1]} : vector<30x8xf32> to vector<2x8xf32>
    %cst_32 = arith.constant dense<0xFF800000> : vector<8xf32>
    %101 = vector.multi_reduction <maximumf>, %100, %cst_32 [0] : vector<2x8xf32> to vector<8xf32>
    %102 = vector.shape_cast %101 : vector<8xf32> to vector<1x8xf32>
    %103 = vector.extract_strided_slice %90 {offsets = [8, 0], sizes = [2, 8], strides = [1, 1]} : vector<30x8xf32> to vector<2x8xf32>
    %cst_33 = arith.constant dense<0xFF800000> : vector<8xf32>
    %104 = vector.multi_reduction <maximumf>, %103, %cst_33 [0] : vector<2x8xf32> to vector<8xf32>
    %105 = vector.shape_cast %104 : vector<8xf32> to vector<1x8xf32>
    %106 = vector.extract_strided_slice %90 {offsets = [10, 0], sizes = [2, 8], strides = [1, 1]} : vector<30x8xf32> to vector<2x8xf32>
    %cst_34 = arith.constant dense<0xFF800000> : vector<8xf32>
    %107 = vector.multi_reduction <maximumf>, %106, %cst_34 [0] : vector<2x8xf32> to vector<8xf32>
    %108 = vector.shape_cast %107 : vector<8xf32> to vector<1x8xf32>
    %109 = vector.extract_strided_slice %90 {offsets = [12, 0], sizes = [2, 8], strides = [1, 1]} : vector<30x8xf32> to vector<2x8xf32>
    %cst_35 = arith.constant dense<0xFF800000> : vector<8xf32>
    %110 = vector.multi_reduction <maximumf>, %109, %cst_35 [0] : vector<2x8xf32> to vector<8xf32>
    %111 = vector.shape_cast %110 : vector<8xf32> to vector<1x8xf32>
    %112 = vector.extract_strided_slice %90 {offsets = [14, 0], sizes = [2, 8], strides = [1, 1]} : vector<30x8xf32> to vector<2x8xf32>
    %cst_36 = arith.constant dense<0xFF800000> : vector<8xf32>
    %113 = vector.multi_reduction <maximumf>, %112, %cst_36 [0] : vector<2x8xf32> to vector<8xf32>
    %114 = vector.shape_cast %113 : vector<8xf32> to vector<1x8xf32>
    %115 = vector.extract_strided_slice %90 {offsets = [16, 0], sizes = [2, 8], strides = [1, 1]} : vector<30x8xf32> to vector<2x8xf32>
    %cst_37 = arith.constant dense<0xFF800000> : vector<8xf32>
    %116 = vector.multi_reduction <maximumf>, %115, %cst_37 [0] : vector<2x8xf32> to vector<8xf32>
    %117 = vector.shape_cast %116 : vector<8xf32> to vector<1x8xf32>
    %118 = vector.extract_strided_slice %90 {offsets = [18, 0], sizes = [2, 8], strides = [1, 1]} : vector<30x8xf32> to vector<2x8xf32>
    %cst_38 = arith.constant dense<0xFF800000> : vector<8xf32>
    %119 = vector.multi_reduction <maximumf>, %118, %cst_38 [0] : vector<2x8xf32> to vector<8xf32>
    %120 = vector.shape_cast %119 : vector<8xf32> to vector<1x8xf32>
    %121 = vector.extract_strided_slice %90 {offsets = [20, 0], sizes = [2, 8], strides = [1, 1]} : vector<30x8xf32> to vector<2x8xf32>
    %cst_39 = arith.constant dense<0xFF800000> : vector<8xf32>
    %122 = vector.multi_reduction <maximumf>, %121, %cst_39 [0] : vector<2x8xf32> to vector<8xf32>
    %123 = vector.shape_cast %122 : vector<8xf32> to vector<1x8xf32>
    %124 = vector.extract_strided_slice %90 {offsets = [22, 0], sizes = [2, 8], strides = [1, 1]} : vector<30x8xf32> to vector<2x8xf32>
    %cst_40 = arith.constant dense<0xFF800000> : vector<8xf32>
    %125 = vector.multi_reduction <maximumf>, %124, %cst_40 [0] : vector<2x8xf32> to vector<8xf32>
    %126 = vector.shape_cast %125 : vector<8xf32> to vector<1x8xf32>
    %127 = vector.extract_strided_slice %90 {offsets = [24, 0], sizes = [2, 8], strides = [1, 1]} : vector<30x8xf32> to vector<2x8xf32>
    %cst_41 = arith.constant dense<0xFF800000> : vector<8xf32>
    %128 = vector.multi_reduction <maximumf>, %127, %cst_41 [0] : vector<2x8xf32> to vector<8xf32>
    %129 = vector.shape_cast %128 : vector<8xf32> to vector<1x8xf32>
    %130 = vector.extract_strided_slice %90 {offsets = [26, 0], sizes = [2, 8], strides = [1, 1]} : vector<30x8xf32> to vector<2x8xf32>
    %cst_42 = arith.constant dense<0xFF800000> : vector<8xf32>
    %131 = vector.multi_reduction <maximumf>, %130, %cst_42 [0] : vector<2x8xf32> to vector<8xf32>
    %132 = vector.shape_cast %131 : vector<8xf32> to vector<1x8xf32>
    %133 = vector.extract_strided_slice %90 {offsets = [28, 0], sizes = [2, 8], strides = [1, 1]} : vector<30x8xf32> to vector<2x8xf32>
    %cst_43 = arith.constant dense<0xFF800000> : vector<8xf32>
    %134 = vector.multi_reduction <maximumf>, %133, %cst_43 [0] : vector<2x8xf32> to vector<8xf32>
    %135 = vector.shape_cast %134 : vector<8xf32> to vector<1x8xf32>
    %136 = tpu.concatenate %93, %96, %99, %102, %105, %108, %111, %114, %117, %120, %123, %126, %129, %132, %135 in 0 : vector<1x8xf32>, vector<1x8xf32>, vector<1x8xf32>, vector<1x8xf32>, vector<1x8xf32>, vector<1x8xf32>, vector<1x8xf32>, vector<1x8xf32>, vector<1x8xf32>, vector<1x8xf32>, vector<1x8xf32>, vector<1x8xf32>, vector<1x8xf32>, vector<1x8xf32>, vector<1x8xf32> -> vector<15x8xf32>
    %137 = vector.extract_strided_slice %89 {offsets = [0, 0], sizes = [13, 8], strides = [1, 1]} : vector<15x8xf32> to vector<13x8xf32>
    %138 = vector.extract_strided_slice %89 {offsets = [1, 0], sizes = [13, 8], strides = [1, 1]} : vector<15x8xf32> to vector<13x8xf32>
    %139 = vector.extract_strided_slice %89 {offsets = [2, 0], sizes = [13, 8], strides = [1, 1]} : vector<15x8xf32> to vector<13x8xf32>
    %140 = tpu.concatenate %137, %138, %139 in 1 : vector<13x8xf32>, vector<13x8xf32>, vector<13x8xf32> -> vector<13x24xf32>
    %141 = vector.extract_strided_slice %136 {offsets = [0, 0], sizes = [13, 8], strides = [1, 1]} : vector<15x8xf32> to vector<13x8xf32>
    %142 = vector.extract_strided_slice %136 {offsets = [1, 0], sizes = [13, 8], strides = [1, 1]} : vector<15x8xf32> to vector<13x8xf32>
    %143 = vector.extract_strided_slice %136 {offsets = [2, 0], sizes = [13, 8], strides = [1, 1]} : vector<15x8xf32> to vector<13x8xf32>
    %144 = tpu.concatenate %141, %142, %143 in 1 : vector<13x8xf32>, vector<13x8xf32>, vector<13x8xf32> -> vector<13x24xf32>
    %145 = tpu.concatenate %140, %144 in 0 : vector<13x24xf32>, vector<13x24xf32> -> vector<26x24xf32>
    %146 = arith.truncf %145 : vector<26x24xf32> to vector<26x24xbf16>
    %c0_44 = arith.constant 0 : index
    %c0_45 = arith.constant 0 : index
    %147 = vector.load %arg4[%c0_44, %c0_45] : memref<24x16xf32, #tpu.memory_space<vmem>>, vector<24x16xf32>
    %148 = arith.truncf %147 : vector<24x16xf32> to vector<24x16xbf16>
    %cst_46 = arith.constant dense<0.000000e+00> : vector<26x16xf32>
    %149 = tpu.matmul %146, %148, %cst_46 {dimension_numbers = #tpu.dot_dimension_numbers<[1], [0], [0], [1], [0, 0, 1, 1], [], []>} : vector<26x24xbf16>, vector<24x16xbf16>, vector<26x16xf32> -> vector<26x16xf32>
    %cst_47 = arith.constant dense<0.000000e+00> : vector<16xf32>
    %150 = vector.multi_reduction <add>, %149, %cst_47 [0] : vector<26x16xf32> to vector<16xf32>
    %151 = vector.shape_cast %150 : vector<16xf32> to vector<1x16xf32>
    %152 = arith.mulf %149, %149 : vector<26x16xf32>
    %cst_48 = arith.constant dense<0.000000e+00> : vector<16xf32>
    %153 = vector.multi_reduction <add>, %152, %cst_48 [0] : vector<26x16xf32> to vector<16xf32>
    %154 = vector.shape_cast %153 : vector<16xf32> to vector<1x16xf32>
    %cst_49 = arith.constant 0.0384615399 : f32
    %155 = vector.broadcast %cst_49 : f32 to vector<1x16xf32>
    %156 = arith.mulf %151, %155 : vector<1x16xf32>
    %cst_50 = arith.constant 0.0384615399 : f32
    %157 = vector.broadcast %cst_50 : f32 to vector<1x16xf32>
    %158 = arith.mulf %154, %157 : vector<1x16xf32>
    %159 = arith.mulf %156, %156 : vector<1x16xf32>
    %160 = arith.subf %158, %159 : vector<1x16xf32>
    %cst_51 = arith.constant 0.000000e+00 : f32
    %161 = vector.broadcast %cst_51 : f32 to vector<1x16xf32>
    %162 = arith.maximumf %160, %161 : vector<1x16xf32>
    %c0_52 = arith.constant 0 : index
    %c0_53 = arith.constant 0 : index
    %163 = vector.load %arg5[%c0_52, %c0_53] : memref<1x16xf32, #tpu.memory_space<vmem>>, vector<1x16xf32>
    %cst_54 = arith.constant 9.99999974E-6 : f32
    %164 = vector.broadcast %cst_54 : f32 to vector<1x16xf32>
    %165 = arith.addf %162, %164 : vector<1x16xf32>
    %166 = math.rsqrt %165 : vector<1x16xf32>
    %167 = arith.mulf %163, %166 : vector<1x16xf32>
    %c0_55 = arith.constant 0 : index
    %c0_56 = arith.constant 0 : index
    %168 = vector.load %arg6[%c0_55, %c0_56] : memref<1x16xf32, #tpu.memory_space<vmem>>, vector<1x16xf32>
    %169 = arith.mulf %156, %167 : vector<1x16xf32>
    %170 = arith.subf %168, %169 : vector<1x16xf32>
    %171 = vector.broadcast %167 : vector<1x16xf32> to vector<26x16xf32>
    %172 = arith.mulf %149, %171 : vector<26x16xf32>
    %173 = vector.broadcast %170 : vector<1x16xf32> to vector<26x16xf32>
    %174 = arith.addf %172, %173 : vector<26x16xf32>
    %cst_57 = arith.constant 0.000000e+00 : f32
    %175 = vector.broadcast %cst_57 : f32 to vector<26x16xf32>
    %176 = arith.maximumf %174, %175 : vector<26x16xf32>
    %177 = vector.extract_strided_slice %176 {offsets = [0, 0], sizes = [13, 16], strides = [1, 1]} : vector<26x16xf32> to vector<13x16xf32>
    %178 = vector.extract_strided_slice %177 {offsets = [0, 0], sizes = [2, 16], strides = [1, 1]} : vector<13x16xf32> to vector<2x16xf32>
    %cst_58 = arith.constant dense<0xFF800000> : vector<16xf32>
    %179 = vector.multi_reduction <maximumf>, %178, %cst_58 [0] : vector<2x16xf32> to vector<16xf32>
    %180 = vector.shape_cast %179 : vector<16xf32> to vector<1x16xf32>
    %181 = vector.extract_strided_slice %177 {offsets = [2, 0], sizes = [2, 16], strides = [1, 1]} : vector<13x16xf32> to vector<2x16xf32>
    %cst_59 = arith.constant dense<0xFF800000> : vector<16xf32>
    %182 = vector.multi_reduction <maximumf>, %181, %cst_59 [0] : vector<2x16xf32> to vector<16xf32>
    %183 = vector.shape_cast %182 : vector<16xf32> to vector<1x16xf32>
    %184 = vector.extract_strided_slice %177 {offsets = [4, 0], sizes = [2, 16], strides = [1, 1]} : vector<13x16xf32> to vector<2x16xf32>
    %cst_60 = arith.constant dense<0xFF800000> : vector<16xf32>
    %185 = vector.multi_reduction <maximumf>, %184, %cst_60 [0] : vector<2x16xf32> to vector<16xf32>
    %186 = vector.shape_cast %185 : vector<16xf32> to vector<1x16xf32>
    %187 = vector.extract_strided_slice %177 {offsets = [6, 0], sizes = [2, 16], strides = [1, 1]} : vector<13x16xf32> to vector<2x16xf32>
    %cst_61 = arith.constant dense<0xFF800000> : vector<16xf32>
    %188 = vector.multi_reduction <maximumf>, %187, %cst_61 [0] : vector<2x16xf32> to vector<16xf32>
    %189 = vector.shape_cast %188 : vector<16xf32> to vector<1x16xf32>
    %190 = vector.extract_strided_slice %177 {offsets = [8, 0], sizes = [2, 16], strides = [1, 1]} : vector<13x16xf32> to vector<2x16xf32>
    %cst_62 = arith.constant dense<0xFF800000> : vector<16xf32>
    %191 = vector.multi_reduction <maximumf>, %190, %cst_62 [0] : vector<2x16xf32> to vector<16xf32>
    %192 = vector.shape_cast %191 : vector<16xf32> to vector<1x16xf32>
    %193 = vector.extract_strided_slice %177 {offsets = [10, 0], sizes = [2, 16], strides = [1, 1]} : vector<13x16xf32> to vector<2x16xf32>
    %cst_63 = arith.constant dense<0xFF800000> : vector<16xf32>
    %194 = vector.multi_reduction <maximumf>, %193, %cst_63 [0] : vector<2x16xf32> to vector<16xf32>
    %195 = vector.shape_cast %194 : vector<16xf32> to vector<1x16xf32>
    %196 = tpu.concatenate %180, %183, %186, %189, %192, %195 in 0 : vector<1x16xf32>, vector<1x16xf32>, vector<1x16xf32>, vector<1x16xf32>, vector<1x16xf32>, vector<1x16xf32> -> vector<6x16xf32>
    %197 = vector.extract_strided_slice %176 {offsets = [13, 0], sizes = [13, 16], strides = [1, 1]} : vector<26x16xf32> to vector<13x16xf32>
    %198 = vector.extract_strided_slice %197 {offsets = [0, 0], sizes = [2, 16], strides = [1, 1]} : vector<13x16xf32> to vector<2x16xf32>
    %cst_64 = arith.constant dense<0xFF800000> : vector<16xf32>
    %199 = vector.multi_reduction <maximumf>, %198, %cst_64 [0] : vector<2x16xf32> to vector<16xf32>
    %200 = vector.shape_cast %199 : vector<16xf32> to vector<1x16xf32>
    %201 = vector.extract_strided_slice %197 {offsets = [2, 0], sizes = [2, 16], strides = [1, 1]} : vector<13x16xf32> to vector<2x16xf32>
    %cst_65 = arith.constant dense<0xFF800000> : vector<16xf32>
    %202 = vector.multi_reduction <maximumf>, %201, %cst_65 [0] : vector<2x16xf32> to vector<16xf32>
    %203 = vector.shape_cast %202 : vector<16xf32> to vector<1x16xf32>
    %204 = vector.extract_strided_slice %197 {offsets = [4, 0], sizes = [2, 16], strides = [1, 1]} : vector<13x16xf32> to vector<2x16xf32>
    %cst_66 = arith.constant dense<0xFF800000> : vector<16xf32>
    %205 = vector.multi_reduction <maximumf>, %204, %cst_66 [0] : vector<2x16xf32> to vector<16xf32>
    %206 = vector.shape_cast %205 : vector<16xf32> to vector<1x16xf32>
    %207 = vector.extract_strided_slice %197 {offsets = [6, 0], sizes = [2, 16], strides = [1, 1]} : vector<13x16xf32> to vector<2x16xf32>
    %cst_67 = arith.constant dense<0xFF800000> : vector<16xf32>
    %208 = vector.multi_reduction <maximumf>, %207, %cst_67 [0] : vector<2x16xf32> to vector<16xf32>
    %209 = vector.shape_cast %208 : vector<16xf32> to vector<1x16xf32>
    %210 = vector.extract_strided_slice %197 {offsets = [8, 0], sizes = [2, 16], strides = [1, 1]} : vector<13x16xf32> to vector<2x16xf32>
    %cst_68 = arith.constant dense<0xFF800000> : vector<16xf32>
    %211 = vector.multi_reduction <maximumf>, %210, %cst_68 [0] : vector<2x16xf32> to vector<16xf32>
    %212 = vector.shape_cast %211 : vector<16xf32> to vector<1x16xf32>
    %213 = vector.extract_strided_slice %197 {offsets = [10, 0], sizes = [2, 16], strides = [1, 1]} : vector<13x16xf32> to vector<2x16xf32>
    %cst_69 = arith.constant dense<0xFF800000> : vector<16xf32>
    %214 = vector.multi_reduction <maximumf>, %213, %cst_69 [0] : vector<2x16xf32> to vector<16xf32>
    %215 = vector.shape_cast %214 : vector<16xf32> to vector<1x16xf32>
    %216 = tpu.concatenate %200, %203, %206, %209, %212, %215 in 0 : vector<1x16xf32>, vector<1x16xf32>, vector<1x16xf32>, vector<1x16xf32>, vector<1x16xf32>, vector<1x16xf32> -> vector<6x16xf32>
    %217 = vector.extract_strided_slice %196 {offsets = [0, 0], sizes = [1, 16], strides = [1, 1]} : vector<6x16xf32> to vector<1x16xf32>
    %218 = vector.extract_strided_slice %196 {offsets = [1, 0], sizes = [1, 16], strides = [1, 1]} : vector<6x16xf32> to vector<1x16xf32>
    %219 = vector.extract_strided_slice %196 {offsets = [2, 0], sizes = [1, 16], strides = [1, 1]} : vector<6x16xf32> to vector<1x16xf32>
    %220 = vector.extract_strided_slice %196 {offsets = [3, 0], sizes = [1, 16], strides = [1, 1]} : vector<6x16xf32> to vector<1x16xf32>
    %221 = vector.extract_strided_slice %196 {offsets = [4, 0], sizes = [1, 16], strides = [1, 1]} : vector<6x16xf32> to vector<1x16xf32>
    %222 = vector.extract_strided_slice %196 {offsets = [5, 0], sizes = [1, 16], strides = [1, 1]} : vector<6x16xf32> to vector<1x16xf32>
    %223 = tpu.concatenate %217, %218, %219, %220, %221, %222 in 1 : vector<1x16xf32>, vector<1x16xf32>, vector<1x16xf32>, vector<1x16xf32>, vector<1x16xf32>, vector<1x16xf32> -> vector<1x96xf32>
    %224 = vector.extract_strided_slice %216 {offsets = [0, 0], sizes = [1, 16], strides = [1, 1]} : vector<6x16xf32> to vector<1x16xf32>
    %225 = vector.extract_strided_slice %216 {offsets = [1, 0], sizes = [1, 16], strides = [1, 1]} : vector<6x16xf32> to vector<1x16xf32>
    %226 = vector.extract_strided_slice %216 {offsets = [2, 0], sizes = [1, 16], strides = [1, 1]} : vector<6x16xf32> to vector<1x16xf32>
    %227 = vector.extract_strided_slice %216 {offsets = [3, 0], sizes = [1, 16], strides = [1, 1]} : vector<6x16xf32> to vector<1x16xf32>
    %228 = vector.extract_strided_slice %216 {offsets = [4, 0], sizes = [1, 16], strides = [1, 1]} : vector<6x16xf32> to vector<1x16xf32>
    %229 = vector.extract_strided_slice %216 {offsets = [5, 0], sizes = [1, 16], strides = [1, 1]} : vector<6x16xf32> to vector<1x16xf32>
    %230 = tpu.concatenate %224, %225, %226, %227, %228, %229 in 1 : vector<1x16xf32>, vector<1x16xf32>, vector<1x16xf32>, vector<1x16xf32>, vector<1x16xf32>, vector<1x16xf32> -> vector<1x96xf32>
    %231 = tpu.concatenate %223, %230 in 0 : vector<1x96xf32>, vector<1x96xf32> -> vector<2x96xf32>
    %232 = arith.truncf %231 : vector<2x96xf32> to vector<2x96xbf16>
    %c0_70 = arith.constant 0 : index
    %c0_71 = arith.constant 0 : index
    %233 = vector.load %arg7[%c0_70, %c0_71] : memref<96x32xf32, #tpu.memory_space<vmem>>, vector<96x32xf32>
    %234 = arith.truncf %233 : vector<96x32xf32> to vector<96x32xbf16>
    %cst_72 = arith.constant dense<0.000000e+00> : vector<2x32xf32>
    %235 = tpu.matmul %232, %234, %cst_72 {dimension_numbers = #tpu.dot_dimension_numbers<[1], [0], [0], [1], [0, 0, 1, 1], [], []>} : vector<2x96xbf16>, vector<96x32xbf16>, vector<2x32xf32> -> vector<2x32xf32>
    %c0_73 = arith.constant 0 : index
    %c0_74 = arith.constant 0 : index
    %236 = vector.load %arg8[%c0_73, %c0_74] : memref<1x32xf32, #tpu.memory_space<vmem>>, vector<1x32xf32>
    %237 = vector.broadcast %236 : vector<1x32xf32> to vector<2x32xf32>
    %238 = arith.addf %235, %237 : vector<2x32xf32>
    %cst_75 = arith.constant 0.000000e+00 : f32
    %239 = vector.broadcast %cst_75 : f32 to vector<2x32xf32>
    %240 = arith.maximumf %238, %239 : vector<2x32xf32>
    %241 = arith.truncf %240 : vector<2x32xf32> to vector<2x32xbf16>
    %c0_76 = arith.constant 0 : index
    %c0_77 = arith.constant 0 : index
    %242 = vector.load %arg9[%c0_76, %c0_77] : memref<32x3xf32, #tpu.memory_space<vmem>>, vector<32x3xf32>
    %243 = arith.truncf %242 : vector<32x3xf32> to vector<32x3xbf16>
    %cst_78 = arith.constant dense<0.000000e+00> : vector<2x3xf32>
    %244 = tpu.matmul %241, %243, %cst_78 {dimension_numbers = #tpu.dot_dimension_numbers<[1], [0], [0], [1], [0, 0, 1, 1], [], []>} : vector<2x32xbf16>, vector<32x3xbf16>, vector<2x3xf32> -> vector<2x3xf32>
    %c0_79 = arith.constant 0 : index
    %c0_80 = arith.constant 0 : index
    %245 = vector.load %arg10[%c0_79, %c0_80] : memref<1x3xf32, #tpu.memory_space<vmem>>, vector<1x3xf32>
    %246 = vector.broadcast %245 : vector<1x3xf32> to vector<2x3xf32>
    %247 = arith.addf %244, %246 : vector<2x3xf32>
    %cst_81 = arith.constant 0.000000e+00 : f32
    %248 = vector.broadcast %cst_81 : f32 to vector<2x3xf32>
    %249 = arith.subf %248, %247 : vector<2x3xf32>
    %250 = math.exp %249 : vector<2x3xf32>
    %cst_82 = arith.constant 1.000000e+00 : f32
    %251 = vector.broadcast %cst_82 : f32 to vector<2x3xf32>
    %252 = arith.addf %251, %250 : vector<2x3xf32>
    %cst_83 = arith.constant 1.000000e+00 : f32
    %253 = vector.broadcast %cst_83 : f32 to vector<2x3xf32>
    %254 = arith.divf %253, %252 : vector<2x3xf32>
    %c0_84 = arith.constant 0 : index
    %c0_85 = arith.constant 0 : index
    %255 = vector.load %arg11[%c0_84, %c0_85] : memref<2x3xf32, #tpu.memory_space<vmem>>, vector<2x3xf32>
    tpu.vector_store %arg11[%c0_84, %c0_85], %254 {strides = array<i32>} : memref<2x3xf32, #tpu.memory_space<vmem>>, vector<2x3xf32>,
    return
  }
}

</mosaic_0001>

<llo_original>
// kernel: tpu_custom_call.1
$region0: #{tpu_custom_call.1}
  #allocation0 [shape = 'u32[]', space=smem, size = 0x4, offset = 0x4, fixed_abs, tag = 'smem constant byte address 0x4 - core index']
  #allocation1 [shape = 'u32[72,128]{1,0:T(1,128)}', space=vmem, size = 0x9000, scoped, tag = 'internal scratch']
  %s0 = inlined_call_operand.vmem [shape: f32[64,4], index: 0, kind: input, shape index: {}]
  %s1 = inlined_call_operand.vmem [shape: f32[12,8], index: 1, kind: input, shape index: {}]
  %s2 = inlined_call_operand.vmem [shape: f32[1,8], index: 2, kind: input, shape index: {}]
  %s3 = inlined_call_operand.vmem [shape: f32[1,8], index: 3, kind: input, shape index: {}]
  %s4 = inlined_call_operand.vmem [shape: f32[24,16], index: 4, kind: input, shape index: {}]
  %s5 = inlined_call_operand.vmem [shape: f32[1,16], index: 5, kind: input, shape index: {}]
  %s6 = inlined_call_operand.vmem [shape: f32[1,16], index: 6, kind: input, shape index: {}]
  %s7 = inlined_call_operand.vmem [shape: f32[96,32], index: 7, kind: input, shape index: {}]
  %s8 = inlined_call_operand.vmem [shape: f32[1,32], index: 8, kind: input, shape index: {}]
  %s9 = inlined_call_operand.vmem [shape: f32[32,3], index: 9, kind: input, shape index: {}]
  %s10 = inlined_call_operand.vmem [shape: f32[1,3], index: 10, kind: input, shape index: {}]
  %s11 = inlined_call_operand.hbm [shape: f32[2,3], index: 11, kind: output, shape index: {}]
  %s12 = sld [smem:[#allocation0]]
  $region54: #{tpu_custom_call.1} parent=0
    _
  %s14 = ssub.s32 1, %s12
  %s15 = scalar_select 0, %s14, %s12
  $region1: #{tpu_custom_call.1} parent=0
    #allocation2 [shape = 'u8[1024]{0}', space=vmem, size = 0x400, scoped, tag = 'output window, operand 0, single buffered']
    #allocation3 [shape = 's32[1]{0}', space=sflag, size = 0x4, scoped, tag = 'scoped memory for tpu_custom_call.1']
    %16 = vsyncpa [#allocation3], 0
    // Predicated region
    $region2: #{tpu_custom_call.1} parent=1 // pred_check
      _
    $region3: #{tpu_custom_call.1} parent=1 // pred_check_branch
      %18 = sbr.rel (0) target = $region5
    $region4: #{tpu_custom_call.1} parent=1 // pred_region
      _
    $region5: #{tpu_custom_call.1} parent=1 // pred_fallthru
      _
    // Predicated region
    $region6: #{tpu_custom_call.1} parent=1 // pred_check
      _
    $region7: #{tpu_custom_call.1} parent=1 // pred_check_branch
      %20 = sbr.rel (0) target = $region9
    $region8: #{tpu_custom_call.1} parent=1 // pred_region
      _
    $region9: #{tpu_custom_call.1} parent=1 // pred_fallthru
      _
    // Predicated region
    $region10: #{tpu_custom_call.1} parent=1 // pred_check
      _
    $region11: #{tpu_custom_call.1} parent=1 // pred_check_branch
      %22 = sbr.rel (0) target = $region13
    $region12: #{tpu_custom_call.1} parent=1 // pred_region
      _
    $region13: #{tpu_custom_call.1} parent=1 // pred_fallthru
      _
    // Predicated region
    $region14: #{tpu_custom_call.1} parent=1 // pred_check
      _
    $region15: #{tpu_custom_call.1} parent=1 // pred_check_branch
      %24 = sbr.rel (0) target = $region17
    $region16: #{tpu_custom_call.1} parent=1 // pred_region
      _
    $region17: #{tpu_custom_call.1} parent=1 // pred_fallthru
      _
    // Predicated region
    $region18: #{tpu_custom_call.1} parent=1 // pred_check
      _
    $region19: #{tpu_custom_call.1} parent=1 // pred_check_branch
      %26 = sbr.rel (0) target = $region21
    $region20: #{tpu_custom_call.1} parent=1 // pred_region
      _
    $region21: #{tpu_custom_call.1} parent=1 // pred_fallthru
      _
    // Predicated region
    $region22: #{tpu_custom_call.1} parent=1 // pred_check
      _
    $region23: #{tpu_custom_call.1} parent=1 // pred_check_branch
      %28 = sbr.rel (0) target = $region25
    $region24: #{tpu_custom_call.1} parent=1 // pred_region
      _
    $region25: #{tpu_custom_call.1} parent=1 // pred_fallthru
      _
    // Predicated region
    $region26: #{tpu_custom_call.1} parent=1 // pred_check
      _
    $region27: #{tpu_custom_call.1} parent=1 // pred_check_branch
      %30 = sbr.rel (0) target = $region29
    $region28: #{tpu_custom_call.1} parent=1 // pred_region
      _
    $region29: #{tpu_custom_call.1} parent=1 // pred_fallthru
      _
    // Predicated region
    $region30: #{tpu_custom_call.1} parent=1 // pred_check
      _
    $region31: #{tpu_custom_call.1} parent=1 // pred_check_branch
      %32 = sbr.rel (0) target = $region33
    $region32: #{tpu_custom_call.1} parent=1 // pred_region
      _
    $region33: #{tpu_custom_call.1} parent=1 // pred_fallthru
      _
    // Predicated region
    $region34: #{tpu_custom_call.1} parent=1 // pred_check
      _
    $region35: #{tpu_custom_call.1} parent=1 // pred_check_branch
      %34 = sbr.rel (0) target = $region37
    $region36: #{tpu_custom_call.1} parent=1 // pred_region
      _
    $region37: #{tpu_custom_call.1} parent=1 // pred_fallthru
      _
    // Predicated region
    $region38: #{tpu_custom_call.1} parent=1 // pred_check
      _
    $region39: #{tpu_custom_call.1} parent=1 // pred_check_branch
      %36 = sbr.rel (0) target = $region41
    $region40: #{tpu_custom_call.1} parent=1 // pred_region
      _
    $region41: #{tpu_custom_call.1} parent=1 // pred_fallthru
      _
    // Predicated region
    $region42: #{tpu_custom_call.1} parent=1 // pred_check
      _
    $region43: #{tpu_custom_call.1} parent=1 // pred_check_branch
      %38 = sbr.rel (0) target = $region45
    $region44: #{tpu_custom_call.1} parent=1 // pred_region
      _
    $region45: #{tpu_custom_call.1} parent=1 // pred_fallthru
      _
    %v40 = vld [vmem:[%s0] sm:$0xff]
    %v41 = vld [vmem:[%s0 + $0x8] sm:$0xff]
    %v42 = vld [vmem:[%s0 + $0x10] sm:$0xff]
    %v43 = vld [vmem:[%s0 + $0x18] sm:$0xff]
    %v44 = vld [vmem:[%s0 + $0x20] sm:$0xff]
    %v45 = vld [vmem:[%s0 + $0x28] sm:$0xff]
    %v46 = vld [vmem:[%s0 + $0x30] sm:$0xff]
    %v47 = vld [vmem:[%s0 + $0x38] sm:$0xff]
    %vm52 = vcmask 1046528
    %v53 = vrot.slane %v40, 1
    %v54 = vrot.slane %v41, 1
    %v55 = vsel %vm52, %v53, %v54
    %v56 = vrot.slane %v42, 1
    %v57 = vsel %vm52, %v54, %v56
    %v58 = vrot.slane %v43, 1
    %v59 = vsel %vm52, %v56, %v58
    %60 = vrot.lane.b32.xlu0 %v55, 4
    %v61 = vpop.permute.xlu0 %60
    %62 = vrot.lane.b32.xlu0 %v57, 4
    %v63 = vpop.permute.xlu0 %62
    %64 = vrot.lane.b32.xlu0 %v59, 4
    %v65 = vpop.permute.xlu0 %64
    %66 = vrot.lane.b32.xlu0 %v58, 4
    %v67 = vpop.permute.xlu0 %66
    %vm72 = vcmask 1045504
    %v73 = vrot.slane %v40, 2
    %v74 = vrot.slane %v41, 2
    %v75 = vsel %vm72, %v73, %v74
    %v76 = vrot.slane %v42, 2
    %v77 = vsel %vm72, %v74, %v76
    %v78 = vrot.slane %v43, 2
    %v79 = vsel %vm72, %v76, %v78
    %80 = vrot.lane.b32.xlu0 %v75, 8
    %v81 = vpop.permute.xlu0 %80
    %82 = vrot.lane.b32.xlu0 %v77, 8
    %v83 = vpop.permute.xlu0 %82
    %84 = vrot.lane.b32.xlu0 %v79, 8
    %v85 = vpop.permute.xlu0 %84
    %86 = vrot.lane.b32.xlu0 %v78, 8
    %v87 = vpop.permute.xlu0 %86
    %vm92 = vcmask 31744
    %v93 = vsel %vm92, %v40, %v61
    %v94 = vsel %vm92, %v41, %v63
    %v95 = vsel %vm92, %v42, %v65
    %v96 = vsel %vm92, %v43, %v67
    %vm97 = vcmask 64512
    %v98 = vsel %vm97, %v93, %v81
    %v99 = vsel %vm97, %v94, %v83
    %v100 = vsel %vm97, %v95, %v85
    %v101 = vsel %vm97, %v96, %v87
    %v106 = vrot.slane %v44, 1
    %v107 = vrot.slane %v45, 1
    %v108 = vsel %vm52, %v106, %v107
    %v109 = vrot.slane %v46, 1
    %v110 = vsel %vm52, %v107, %v109
    %v111 = vrot.slane %v47, 1
    %v112 = vsel %vm52, %v109, %v111
    %113 = vrot.lane.b32.xlu0 %v108, 4
    %v114 = vpop.permute.xlu0 %113
    %115 = vrot.lane.b32.xlu0 %v110, 4
    %v116 = vpop.permute.xlu0 %115
    %117 = vrot.lane.b32.xlu0 %v112, 4
    %v118 = vpop.permute.xlu0 %117
    %119 = vrot.lane.b32.xlu0 %v111, 4
    %v120 = vpop.permute.xlu0 %119
    %v125 = vrot.slane %v44, 2
    %v126 = vrot.slane %v45, 2
    %v127 = vsel %vm72, %v125, %v126
    %v128 = vrot.slane %v46, 2
    %v129 = vsel %vm72, %v126, %v128
    %v130 = vrot.slane %v47, 2
    %v131 = vsel %vm72, %v128, %v130
    %132 = vrot.lane.b32.xlu0 %v127, 8
    %v133 = vpop.permute.xlu0 %132
    %134 = vrot.lane.b32.xlu0 %v129, 8
    %v135 = vpop.permute.xlu0 %134
    %136 = vrot.lane.b32.xlu0 %v131, 8
    %v137 = vpop.permute.xlu0 %136
    %138 = vrot.lane.b32.xlu0 %v130, 8
    %v139 = vpop.permute.xlu0 %138
    %v144 = vsel %vm92, %v44, %v114
    %v145 = vsel %vm92, %v45, %v116
    %v146 = vsel %vm92, %v46, %v118
    %v147 = vsel %vm92, %v47, %v120
    %v148 = vsel %vm97, %v144, %v133
    %v149 = vsel %vm97, %v145, %v135
    %v150 = vsel %vm97, %v146, %v137
    %v151 = vsel %vm97, %v147, %v139
    %v156 = vrot.slane %v148, 2
    %v157 = vrot.slane %v149, 2
    %v158 = vsel %vm72, %v156, %v157
    %v159 = vrot.slane %v150, 2
    %v160 = vsel %vm72, %v157, %v159
    %v161 = vrot.slane %v151, 2
    %v162 = vsel %vm72, %v159, %v161
    %v168 = vsel %vm72, %v101, %v156
    %v169 = vpack.c.bf16 %v99, %v98
    %v170 = vpack.c.bf16 %v168, %v100
    %v171 = vpack.c.bf16 %v160, %v158
    %v172 = vpack.c.bf16 %v161, %v162
    %v173 = vld [vmem:[%s1] sm:$0xff]
    %v174 = vld [vmem:[%s1 + $0x8] sm:$0xf]
    %v175 = vpack.c.bf16 %v174, %v173
    %vm176 = vcmask 97280
    %v178 = vsel %vm176, %v169, 0
    %v181 = vsel %vm176, %v170, 0
    %v184 = vsel %vm176, %v171, 0
    %v187 = vsel %vm176, %v172, 0
    %v190 = vsel %vm72, %v175, 0
    %192 = vmatpush.bf16.msra.mxu0 0
    %193 = vmatpush.bf16.msra.mxu0 0
    %194 = vmatpush.bf16.msra.mxu0 0
    %195 = vmatpush.bf16.msra.mxu0 0
    %196 = vmatpush.bf16.msra.mxu0 0
    %197 = vmatpush.bf16.msra.mxu0 0
    %198 = vmatpush.bf16.msra.mxu0 0
    %199 = vmatpush.bf16.msra.mxu0 %v190
    %200 = vmatmul.bf16.gmra.mxu0 %v178
    %v201 = vpop.f32.mrf.mxu0
    %v202 = vadd.f32 0.0, %v201
    %v203 = vpop.f32.mrf.mxu0
    %v204 = vadd.f32 0.0, %v203
    %205 = vmatmul.bf16.gmra.mxu0 %v181
    %v206 = vpop.f32.mrf.mxu0
    %v207 = vadd.f32 0.0, %v206
    %v208 = vpop.f32.mrf.mxu0
    %v209 = vadd.f32 0.0, %v208
    %210 = vmatmul.bf16.gmra.mxu0 %v184
    %v211 = vpop.f32.mrf.mxu0
    %v212 = vadd.f32 0.0, %v211
    %v213 = vpop.f32.mrf.mxu0
    %v214 = vadd.f32 0.0, %v213
    %215 = vmatmul.bf16.gmra.mxu0 %v187
    %v216 = vpop.f32.mrf.mxu0
    %v217 = vadd.f32 0.0, %v216
    %v218 = vpop.f32.mrf.mxu0
    %v219 = vadd.f32 0.0, %v218
    %220 = vdwg.mxu0
    %v221 = vsel %vm97, %v202, 0.0
    %v222 = vsel %vm97, %v204, 0.0
    %v223 = vadd.f32 %v221, %v222
    %v224 = vsel %vm97, %v207, 0.0
    %v225 = vadd.f32 %v223, %v224
    %v226 = vsel %vm97, %v209, 0.0
    %v227 = vadd.f32 %v225, %v226
    %v228 = vsel %vm97, %v212, 0.0
    %v229 = vadd.f32 %v227, %v228
    %v230 = vsel %vm97, %v214, 0.0
    %v231 = vadd.f32 %v229, %v230
    %v232 = vsel %vm97, %v217, 0.0
    %v233 = vadd.f32 %v231, %v232
    %vm234 = vcmask 60416
    %v235 = vsel %vm234, %v219, 0.0
    %v236 = vadd.f32 %v233, %v235
    %v237 = vrot.slane %v236, 4
    %v238 = vadd.f32 %v236, %v237
    %v239 = vrot.slane %v238, 2
    %v240 = vadd.f32 %v238, %v239
    %v241 = vrot.slane %v240, 1
    %v242 = vadd.f32 %v240, %v241
    %v243 = vmul.f32 %v202, %v202
    %v244 = vmul.f32 %v204, %v204
    %v245 = vmul.f32 %v207, %v207
    %v246 = vmul.f32 %v209, %v209
    %v247 = vmul.f32 %v212, %v212
    %v248 = vmul.f32 %v214, %v214
    %v249 = vmul.f32 %v217, %v217
    %v250 = vmul.f32 %v219, %v219
    %v251 = vsel %vm97, %v243, 0.0
    %v252 = vsel %vm97, %v244, 0.0
    %v253 = vadd.f32 %v251, %v252
    %v254 = vsel %vm97, %v245, 0.0
    %v255 = vadd.f32 %v253, %v254
    %v256 = vsel %vm97, %v246, 0.0
    %v257 = vadd.f32 %v255, %v256
    %v258 = vsel %vm97, %v247, 0.0
    %v259 = vadd.f32 %v257, %v258
    %v260 = vsel %vm97, %v248, 0.0
    %v261 = vadd.f32 %v259, %v260
    %v262 = vsel %vm97, %v249, 0.0
    %v263 = vadd.f32 %v261, %v262
    %v264 = vsel %vm234, %v250, 0.0
    %v265 = vadd.f32 %v263, %v264
    %v266 = vrot.slane %v265, 4
    %v267 = vadd.f32 %v265, %v266
    %v268 = vrot.slane %v267, 2
    %v269 = vadd.f32 %v267, %v268
    %v270 = vrot.slane %v269, 1
    %v271 = vadd.f32 %v269, %v270
    %v272 = vmul.f32 %v242, 0.016666668
    %v273 = vmul.f32 %v271, 0.016666668
    %v274 = vmul.f32 %v272, %v272
    %v275 = vsub.f32 %v273, %v274
    %v276 = vmax.f32 %v275, 0.0
    %v277 = vld [vmem:[%s2] sm:$0x1]
    %v278 = vadd.f32 %v276, 1e-05
    %v279 = vrsqrt.pop %v278
    %v280 = vmul.f32 %v279, %v278
    %v281 = vmul.f32 %v280, %v279
    %v282 = vmul.f32 0.5, %v281
    %v283 = vsub.f32 1.5, %v282
    %v284 = vmul.f32 %v279, %v283
    %vm285 = vweird.f32 %v278
    %vm286 = vweird.f32 %v279
    %vm287 = vmor %vm285, %vm286
    %v288 = vsel %vm287, %v279, %v284
    %v289 = vmul.f32 %v277, %v288
    %v290 = vld [vmem:[%s3] sm:$0x1]
    %v291 = vmul.f32 %v272, %v289
    %v292 = vsub.f32 %v290, %v291
    %v294 = vperm.slane %v289, 0
    %v296 = vmul.f32 %v202, %v294
    %v297 = vmul.f32 %v204, %v294
    %v298 = vmul.f32 %v207, %v294
    %v299 = vmul.f32 %v209, %v294
    %v300 = vmul.f32 %v212, %v294
    %v301 = vmul.f32 %v214, %v294
    %v302 = vmul.f32 %v217, %v294
    %v303 = vmul.f32 %v219, %v294
    %v305 = vperm.slane %v292, 0
    %v307 = vadd.f32 %v296, %v305
    %v308 = vadd.f32 %v297, %v305
    %v309 = vadd.f32 %v298, %v305
    %v310 = vadd.f32 %v299, %v305
    %v311 = vadd.f32 %v300, %v305
    %v312 = vadd.f32 %v301, %v305
    %v313 = vadd.f32 %v302, %v305
    %v314 = vadd.f32 %v303, %v305
    %v315 = vmax.f32 %v307, 0.0
    %v316 = vmax.f32 %v308, 0.0
    %v317 = vmax.f32 %v309, 0.0
    %v318 = vmax.f32 %v310, 0.0
    %v319 = vmax.f32 %v311, 0.0
    %v320 = vmax.f32 %v312, 0.0
    %v321 = vmax.f32 %v313, 0.0
    %v322 = vmax.f32 %v314, 0.0
    %vm323 = vcmask 58368
    %v324 = vsel %vm323, %v315, -inf
    %v325 = vrot.slane %v324, 4
    %v326 = vmax.f32 %v324, %v325
    %v327 = vrot.slane %v326, 2
    %v328 = vmax.f32 %v326, %v327
    %v329 = vrot.slane %v328, 1
    %v330 = vmax.f32 %v328, %v329
    %vm331 = vcmask 60418
    %v332 = vsel %vm331, %v315, -inf
    %v333 = vrot.slane %v332, 4
    %v334 = vmax.f32 %v332, %v333
    %v335 = vrot.slane %v334, 2
    %v336 = vmax.f32 %v334, %v335
    %v337 = vrot.slane %v336, 1
    %v338 = vmax.f32 %v336, %v337
    %vm339 = vcmask 62468
    %v340 = vsel %vm339, %v315, -inf
    %v341 = vrot.slane %v340, 4
    %v342 = vmax.f32 %v340, %v341
    %v343 = vrot.slane %v342, 2
    %v344 = vmax.f32 %v342, %v343
    %v345 = vrot.slane %v344, 1
    %v346 = vmax.f32 %v344, %v345
    %vm347 = vcmask 64518
    %v348 = vsel %vm347, %v315, -inf
    %v349 = vrot.slane %v348, 4
    %v350 = vmax.f32 %v348, %v349
    %v351 = vrot.slane %v350, 2
    %v352 = vmax.f32 %v350, %v351
    %v353 = vrot.slane %v352, 1
    %v354 = vmax.f32 %v352, %v353
    %v355 = vsel %vm323, %v316, -inf
    %v356 = vrot.slane %v355, 4
    %v357 = vmax.f32 %v355, %v356
    %v358 = vrot.slane %v357, 2
    %v359 = vmax.f32 %v357, %v358
    %v360 = vrot.slane %v359, 1
    %v361 = vmax.f32 %v359, %v360
    %v362 = vsel %vm331, %v316, -inf
    %v363 = vrot.slane %v362, 4
    %v364 = vmax.f32 %v362, %v363
    %v365 = vrot.slane %v364, 2
    %v366 = vmax.f32 %v364, %v365
    %v367 = vrot.slane %v366, 1
    %v368 = vmax.f32 %v366, %v367
    %v369 = vsel %vm339, %v316, -inf
    %v370 = vrot.slane %v369, 4
    %v371 = vmax.f32 %v369, %v370
    %v372 = vrot.slane %v371, 2
    %v373 = vmax.f32 %v371, %v372
    %v374 = vrot.slane %v373, 1
    %v375 = vmax.f32 %v373, %v374
    %v376 = vsel %vm347, %v316, -inf
    %v377 = vrot.slane %v376, 4
    %v378 = vmax.f32 %v376, %v377
    %v379 = vrot.slane %v378, 2
    %v380 = vmax.f32 %v378, %v379
    %v381 = vrot.slane %v380, 1
    %v382 = vmax.f32 %v380, %v381
    %v383 = vsel %vm323, %v317, -inf
    %v384 = vrot.slane %v383, 4
    %v385 = vmax.f32 %v383, %v384
    %v386 = vrot.slane %v385, 2
    %v387 = vmax.f32 %v385, %v386
    %v388 = vrot.slane %v387, 1
    %v389 = vmax.f32 %v387, %v388
    %v390 = vsel %vm331, %v317, -inf
    %v391 = vrot.slane %v390, 4
    %v392 = vmax.f32 %v390, %v391
    %v393 = vrot.slane %v392, 2
    %v394 = vmax.f32 %v392, %v393
    %v395 = vrot.slane %v394, 1
    %v396 = vmax.f32 %v394, %v395
    %v397 = vsel %vm339, %v317, -inf
    %v398 = vrot.slane %v397, 4
    %v399 = vmax.f32 %v397, %v398
    %v400 = vrot.slane %v399, 2
    %v401 = vmax.f32 %v399, %v400
    %v402 = vrot.slane %v401, 1
    %v403 = vmax.f32 %v401, %v402
    %v404 = vsel %vm347, %v317, -inf
    %v405 = vrot.slane %v404, 4
    %v406 = vmax.f32 %v404, %v405
    %v407 = vrot.slane %v406, 2
    %v408 = vmax.f32 %v406, %v407
    %v409 = vrot.slane %v408, 1
    %v410 = vmax.f32 %v408, %v409
    %v411 = vsel %vm323, %v318, -inf
    %v412 = vrot.slane %v411, 4
    %v413 = vmax.f32 %v411, %v412
    %v414 = vrot.slane %v413, 2
    %v415 = vmax.f32 %v413, %v414
    %v416 = vrot.slane %v415, 1
    %v417 = vmax.f32 %v415, %v416
    %v418 = vsel %vm331, %v318, -inf
    %v419 = vrot.slane %v418, 4
    %v420 = vmax.f32 %v418, %v419
    %v421 = vrot.slane %v420, 2
    %v422 = vmax.f32 %v420, %v421
    %v423 = vrot.slane %v422, 1
    %v424 = vmax.f32 %v422, %v423
    %v425 = vsel %vm339, %v318, -inf
    %v426 = vrot.slane %v425, 4
    %v427 = vmax.f32 %v425, %v426
    %v428 = vrot.slane %v427, 2
    %v429 = vmax.f32 %v427, %v428
    %v430 = vrot.slane %v429, 1
    %v431 = vmax.f32 %v429, %v430
    %vm432 = vcmask 1040384
    %v433 = vsel %vm432, %v330, %v338
    %vm434 = vcmask 1041408
    %v435 = vsel %vm434, %v433, %v346
    %vm436 = vcmask 1042432
    %v437 = vsel %vm436, %v435, %v354
    %vm438 = vcmask 1043456
    %v439 = vsel %vm438, %v437, %v361
    %vm440 = vcmask 1044480
    %v441 = vsel %vm440, %v439, %v368
    %v442 = vsel %vm72, %v441, %v375
    %v443 = vsel %vm52, %v442, %v382
    %v444 = vsel %vm432, %v389, %v396
    %v445 = vsel %vm434, %v444, %v403
    %v446 = vsel %vm436, %v445, %v410
    %v447 = vsel %vm438, %v446, %v417
    %v448 = vsel %vm440, %v447, %v424
    %v449 = vsel %vm72, %v448, %v431
    %v450 = vsel %vm347, %v318, -inf
    %v451 = vrot.slane %v450, 4
    %v452 = vmax.f32 %v450, %v451
    %v453 = vrot.slane %v452, 2
    %v454 = vmax.f32 %v452, %v453
    %v455 = vrot.slane %v454, 1
    %v456 = vmax.f32 %v454, %v455
    %v457 = vsel %vm323, %v319, -inf
    %v458 = vrot.slane %v457, 4
    %v459 = vmax.f32 %v457, %v458
    %v460 = vrot.slane %v459, 2
    %v461 = vmax.f32 %v459, %v460
    %v462 = vrot.slane %v461, 1
    %v463 = vmax.f32 %v461, %v462
    %v464 = vsel %vm331, %v319, -inf
    %v465 = vrot.slane %v464, 4
    %v466 = vmax.f32 %v464, %v465
    %v467 = vrot.slane %v466, 2
    %v468 = vmax.f32 %v466, %v467
    %v469 = vrot.slane %v468, 1
    %v470 = vmax.f32 %v468, %v469
    %v471 = vsel %vm339, %v319, -inf
    %v472 = vrot.slane %v471, 4
    %v473 = vmax.f32 %v471, %v472
    %v474 = vrot.slane %v473, 2
    %v475 = vmax.f32 %v473, %v474
    %v476 = vrot.slane %v475, 1
    %v477 = vmax.f32 %v475, %v476
    %v478 = vsel %vm347, %v319, -inf
    %v479 = vrot.slane %v478, 4
    %v480 = vmax.f32 %v478, %v479
    %v481 = vrot.slane %v480, 2
    %v482 = vmax.f32 %v480, %v481
    %v483 = vrot.slane %v482, 1
    %v484 = vmax.f32 %v482, %v483
    %v485 = vsel %vm323, %v320, -inf
    %v486 = vrot.slane %v485, 4
    %v487 = vmax.f32 %v485, %v486
    %v488 = vrot.slane %v487, 2
    %v489 = vmax.f32 %v487, %v488
    %v490 = vrot.slane %v489, 1
    %v491 = vmax.f32 %v489, %v490
    %v492 = vsel %vm331, %v320, -inf
    %v493 = vrot.slane %v492, 4
    %v494 = vmax.f32 %v492, %v493
    %v495 = vrot.slane %v494, 2
    %v496 = vmax.f32 %v494, %v495
    %v497 = vrot.slane %v496, 1
    %v498 = vmax.f32 %v496, %v497
    %v499 = vsel %vm339, %v320, -inf
    %v500 = vrot.slane %v499, 4
    %v501 = vmax.f32 %v499, %v500
    %v502 = vrot.slane %v501, 2
    %v503 = vmax.f32 %v501, %v502
    %v504 = vrot.slane %v503, 1
    %v505 = vmax.f32 %v503, %v504
    %v506 = vsel %vm347, %v320, -inf
    %v507 = vrot.slane %v506, 4
    %v508 = vmax.f32 %v506, %v507
    %v509 = vrot.slane %v508, 2
    %v510 = vmax.f32 %v508, %v509
    %v511 = vrot.slane %v510, 1
    %v512 = vmax.f32 %v510, %v511
    %v513 = vsel %vm323, %v321, -inf
    %v514 = vrot.slane %v513, 4
    %v515 = vmax.f32 %v513, %v514
    %v516 = vrot.slane %v515, 2
    %v517 = vmax.f32 %v515, %v516
    %v518 = vrot.slane %v517, 1
    %v519 = vmax.f32 %v517, %v518
    %v520 = vsel %vm331, %v321, -inf
    %v521 = vrot.slane %v520, 4
    %v522 = vmax.f32 %v520, %v521
    %v523 = vrot.slane %v522, 2
    %v524 = vmax.f32 %v522, %v523
    %v525 = vrot.slane %v524, 1
    %v526 = vmax.f32 %v524, %v525
    %v527 = vsel %vm339, %v321, -inf
    %v528 = vrot.slane %v527, 4
    %v529 = vmax.f32 %v527, %v528
    %v530 = vrot.slane %v529, 2
    %v531 = vmax.f32 %v529, %v530
    %v532 = vrot.slane %v531, 1
    %v533 = vmax.f32 %v531, %v532
    %v534 = vsel %vm347, %v321, -inf
    %v535 = vrot.slane %v534, 4
    %v536 = vmax.f32 %v534, %v535
    %v537 = vrot.slane %v536, 2
    %v538 = vmax.f32 %v536, %v537
    %v539 = vrot.slane %v538, 1
    %v540 = vmax.f32 %v538, %v539
    %v541 = vsel %vm323, %v322, -inf
    %v542 = vrot.slane %v541, 4
    %v543 = vmax.f32 %v541, %v542
    %v544 = vrot.slane %v543, 2
    %v545 = vmax.f32 %v543, %v544
    %v546 = vrot.slane %v545, 1
    %v547 = vmax.f32 %v545, %v546
    %v548 = vsel %vm331, %v322, -inf
    %v549 = vrot.slane %v548, 4
    %v550 = vmax.f32 %v548, %v549
    %v551 = vrot.slane %v550, 2
    %v552 = vmax.f32 %v550, %v551
    %v553 = vrot.slane %v552, 1
    %v554 = vmax.f32 %v552, %v553
    %v555 = vsel %vm432, %v456, %v463
    %v556 = vsel %vm434, %v555, %v470
    %v557 = vsel %vm436, %v556, %v477
    %v558 = vsel %vm438, %v557, %v484
    %v559 = vsel %vm440, %v558, %v491
    %v560 = vsel %vm72, %v559, %v498
    %v561 = vsel %vm52, %v560, %v505
    %v562 = vsel %vm432, %v512, %v519
    %v563 = vsel %vm434, %v562, %v526
    %v564 = vsel %vm436, %v563, %v533
    %v565 = vsel %vm438, %v564, %v540
    %v566 = vsel %vm440, %v565, %v547
    %v567 = vsel %vm72, %v566, %v554
    %v570 = vrot.slane %v443, 1
    %v571 = vrot.slane %v449, 1
    %v572 = vsel %vm52, %v570, %v571
    %573 = vrot.lane.b32.xlu0 %v572, 8
    %v574 = vpop.permute.xlu0 %573
    %575 = vrot.lane.b32.xlu0 %v571, 8
    %v576 = vpop.permute.xlu0 %575
    %v579 = vrot.slane %v443, 2
    %v580 = vrot.slane %v449, 2
    %v581 = vsel %vm72, %v579, %v580
    %582 = vrot.lane.b32.xlu0 %v581, 16
    %v583 = vpop.permute.xlu0 %582
    %584 = vrot.lane.b32.xlu0 %v580, 16
    %v585 = vpop.permute.xlu0 %584
    %v588 = vsel %vm97, %v443, %v574
    %v589 = vsel %vm97, %v449, %v576
    %vm590 = vcmask 130048
    %v591 = vsel %vm590, %v588, %v583
    %v592 = vsel %vm590, %v589, %v585
    %v595 = vrot.slane %v561, 1
    %v596 = vrot.slane %v567, 1
    %v597 = vsel %vm52, %v595, %v596
    %598 = vrot.lane.b32.xlu0 %v597, 8
    %v599 = vpop.permute.xlu0 %598
    %600 = vrot.lane.b32.xlu0 %v596, 8
    %v601 = vpop.permute.xlu0 %600
    %v604 = vrot.slane %v561, 2
    %v605 = vrot.slane %v567, 2
    %v606 = vsel %vm72, %v604, %v605
    %607 = vrot.lane.b32.xlu0 %v606, 16
    %v608 = vpop.permute.xlu0 %607
    %609 = vrot.lane.b32.xlu0 %v605, 16
    %v610 = vpop.permute.xlu0 %609
    %v613 = vsel %vm97, %v561, %v599
    %v614 = vsel %vm97, %v567, %v601
    %v615 = vsel %vm590, %v613, %v608
    %v616 = vsel %vm590, %v614, %v610
    %v619 = vrot.slane %v615, 3
    %v620 = vrot.slane %v616, 3
    %v621 = vsel %vm440, %v619, %v620
    %v625 = vsel %vm440, %v592, %v619
    %v626 = vpack.c.bf16 %v625, %v591
    %v627 = vpack.c.bf16 %v620, %v621
    %v628 = vld [vmem:[%s4] sm:$0xff]
    %v629 = vld [vmem:[%s4 + $0x8] sm:$0xff]
    %v630 = vld [vmem:[%s4 + $0x10] sm:$0xff]
    %v631 = vpack.c.bf16 %v629, %v628
    %v632 = vpack.c.bf16 %v630, %v630
    %vm633 = vcmask 195584
    %v635 = vsel %vm633, %v626, 0
    %v638 = vsel %vm633, %v627, 0
    %v641 = vsel %vm438, %v632, 0
    %643 = vmatpush.bf16.msra.mxu0 0
    %644 = vmatpush.bf16.msra.mxu0 0
    %645 = vmatpush.bf16.msra.mxu0 0
    %646 = vmatpush.bf16.msra.mxu0 0
    %647 = vmatpush.bf16.msra.mxu0 0
    %648 = vmatpush.bf16.msra.mxu0 0
    %649 = vmatpush.bf16.msra.mxu0 %v641
    %650 = vmatpush.bf16.msra.mxu0 %v631
    %651 = vmatmul.bf16.gmra.mxu0 %v635
    %v652 = vpop.f32.mrf.mxu0
    %v653 = vadd.f32 0.0, %v652
    %v654 = vpop.f32.mrf.mxu0
    %v655 = vadd.f32 0.0, %v654
    %656 = vmatmul.bf16.gmra.mxu0 %v638
    %v657 = vpop.f32.mrf.mxu0
    %v658 = vadd.f32 0.0, %v657
    %v659 = vpop.f32.mrf.mxu0
    %v660 = vadd.f32 0.0, %v659
    %661 = vdwg.mxu0
    %v662 = vsel %vm590, %v653, 0.0
    %v663 = vsel %vm590, %v655, 0.0
    %v664 = vadd.f32 %v662, %v663
    %v665 = vsel %vm590, %v658, 0.0
    %v666 = vadd.f32 %v664, %v665
    %vm667 = vcmask 123904
    %v668 = vsel %vm667, %v660, 0.0
    %v669 = vadd.f32 %v666, %v668
    %v670 = vrot.slane %v669, 4
    %v671 = vadd.f32 %v669, %v670
    %v672 = vrot.slane %v671, 2
    %v673 = vadd.f32 %v671, %v672
    %v674 = vrot.slane %v673, 1
    %v675 = vadd.f32 %v673, %v674
    %v676 = vmul.f32 %v653, %v653
    %v677 = vmul.f32 %v655, %v655
    %v678 = vmul.f32 %v658, %v658
    %v679 = vmul.f32 %v660, %v660
    %v680 = vsel %vm590, %v676, 0.0
    %v681 = vsel %vm590, %v677, 0.0
    %v682 = vadd.f32 %v680, %v681
    %v683 = vsel %vm590, %v678, 0.0
    %v684 = vadd.f32 %v682, %v683
    %v685 = vsel %vm667, %v679, 0.0
    %v686 = vadd.f32 %v684, %v685
    %v687 = vrot.slane %v686, 4
    %v688 = vadd.f32 %v686, %v687
    %v689 = vrot.slane %v688, 2
    %v690 = vadd.f32 %v688, %v689
    %v691 = vrot.slane %v690, 1
    %v692 = vadd.f32 %v690, %v691
    %v693 = vmul.f32 %v675, 0.03846154
    %v694 = vmul.f32 %v692, 0.03846154
    %v695 = vmul.f32 %v693, %v693
    %v696 = vsub.f32 %v694, %v695
    %v697 = vmax.f32 %v696, 0.0
    %v698 = vld [vmem:[%s5] sm:$0x1]
    %v699 = vadd.f32 %v697, 1e-05
    %v700 = vrsqrt.pop %v699
    %v701 = vmul.f32 %v700, %v699
    %v702 = vmul.f32 %v701, %v700
    %v703 = vmul.f32 0.5, %v702
    %v704 = vsub.f32 1.5, %v703
    %v705 = vmul.f32 %v700, %v704
    %vm706 = vweird.f32 %v699
    %vm707 = vweird.f32 %v700
    %vm708 = vmor %vm706, %vm707
    %v709 = vsel %vm708, %v700, %v705
    %v710 = vmul.f32 %v698, %v709
    %v711 = vld [vmem:[%s6] sm:$0x1]
    %v712 = vmul.f32 %v693, %v710
    %v713 = vsub.f32 %v711, %v712
    %v715 = vperm.slane %v710, 0
    %v717 = vmul.f32 %v653, %v715
    %v718 = vmul.f32 %v655, %v715
    %v719 = vmul.f32 %v658, %v715
    %v720 = vmul.f32 %v660, %v715
    %v722 = vperm.slane %v713, 0
    %v724 = vadd.f32 %v717, %v722
    %v725 = vadd.f32 %v718, %v722
    %v726 = vadd.f32 %v719, %v722
    %v727 = vadd.f32 %v720, %v722
    %v728 = vmax.f32 %v724, 0.0
    %v729 = vmax.f32 %v725, 0.0
    %v730 = vmax.f32 %v726, 0.0
    %v731 = vmax.f32 %v727, 0.0
    %v732 = vsel %vm667, %v728, -inf
    %v733 = vrot.slane %v732, 4
    %v734 = vmax.f32 %v732, %v733
    %v735 = vrot.slane %v734, 2
    %v736 = vmax.f32 %v734, %v735
    %v737 = vrot.slane %v736, 1
    %v738 = vmax.f32 %v736, %v737
    %vm739 = vcmask 125954
    %v740 = vsel %vm739, %v728, -inf
    %v741 = vrot.slane %v740, 4
    %v742 = vmax.f32 %v740, %v741
    %v743 = vrot.slane %v742, 2
    %v744 = vmax.f32 %v742, %v743
    %v745 = vrot.slane %v744, 1
    %v746 = vmax.f32 %v744, %v745
    %vm747 = vcmask 128004
    %v748 = vsel %vm747, %v728, -inf
    %v749 = vrot.slane %v748, 4
    %v750 = vmax.f32 %v748, %v749
    %v751 = vrot.slane %v750, 2
    %v752 = vmax.f32 %v750, %v751
    %v753 = vrot.slane %v752, 1
    %v754 = vmax.f32 %v752, %v753
    %vm755 = vcmask 130054
    %v756 = vsel %vm755, %v728, -inf
    %v757 = vrot.slane %v756, 4
    %v758 = vmax.f32 %v756, %v757
    %v759 = vrot.slane %v758, 2
    %v760 = vmax.f32 %v758, %v759
    %v761 = vrot.slane %v760, 1
    %v762 = vmax.f32 %v760, %v761
    %v763 = vsel %vm667, %v729, -inf
    %v764 = vrot.slane %v763, 4
    %v765 = vmax.f32 %v763, %v764
    %v766 = vrot.slane %v765, 2
    %v767 = vmax.f32 %v765, %v766
    %v768 = vrot.slane %v767, 1
    %v769 = vmax.f32 %v767, %v768
    %v770 = vsel %vm739, %v729, -inf
    %v771 = vrot.slane %v770, 4
    %v772 = vmax.f32 %v770, %v771
    %v773 = vrot.slane %v772, 2
    %v774 = vmax.f32 %v772, %v773
    %v775 = vrot.slane %v774, 1
    %v776 = vmax.f32 %v774, %v775
    %v777 = vsel %vm432, %v738, %v746
    %v778 = vsel %vm434, %v777, %v754
    %v779 = vsel %vm436, %v778, %v762
    %v780 = vsel %vm438, %v779, %v769
    %v781 = vsel %vm440, %v780, %v776
    %vm782 = vcmask 129029
    %v783 = vsel %vm782, %v729, -inf
    %v784 = vrot.slane %v783, 4
    %v785 = vmax.f32 %v783, %v784
    %v786 = vrot.slane %v785, 2
    %v787 = vmax.f32 %v785, %v786
    %v788 = vrot.slane %v787, 1
    %v789 = vmax.f32 %v787, %v788
    %vm790 = vcmask 130055
    %v791 = vsel %vm790, %v729, -inf
    %vm792 = vcmask 122880
    %v793 = vsel %vm792, %v730, -inf
    %v794 = vmax.f32 %v791, %v793
    %v795 = vrot.slane %v794, 4
    %v796 = vmax.f32 %v794, %v795
    %v797 = vrot.slane %v796, 2
    %v798 = vmax.f32 %v796, %v797
    %v799 = vrot.slane %v798, 1
    %v800 = vmax.f32 %v798, %v799
    %vm801 = vcmask 124929
    %v802 = vsel %vm801, %v730, -inf
    %v803 = vrot.slane %v802, 4
    %v804 = vmax.f32 %v802, %v803
    %v805 = vrot.slane %v804, 2
    %v806 = vmax.f32 %v804, %v805
    %v807 = vrot.slane %v806, 1
    %v808 = vmax.f32 %v806, %v807
    %vm809 = vcmask 126979
    %v810 = vsel %vm809, %v730, -inf
    %v811 = vrot.slane %v810, 4
    %v812 = vmax.f32 %v810, %v811
    %v813 = vrot.slane %v812, 2
    %v814 = vmax.f32 %v812, %v813
    %v815 = vrot.slane %v814, 1
    %v816 = vmax.f32 %v814, %v815
    %v817 = vsel %vm782, %v730, -inf
    %v818 = vrot.slane %v817, 4
    %v819 = vmax.f32 %v817, %v818
    %v820 = vrot.slane %v819, 2
    %v821 = vmax.f32 %v819, %v820
    %v822 = vrot.slane %v821, 1
    %v823 = vmax.f32 %v821, %v822
    %v824 = vsel %vm790, %v730, -inf
    %v825 = vsel %vm792, %v731, -inf
    %v826 = vmax.f32 %v824, %v825
    %v827 = vrot.slane %v826, 4
    %v828 = vmax.f32 %v826, %v827
    %v829 = vrot.slane %v828, 2
    %v830 = vmax.f32 %v828, %v829
    %v831 = vrot.slane %v830, 1
    %v832 = vmax.f32 %v830, %v831
    %v833 = vsel %vm432, %v789, %v800
    %v834 = vsel %vm434, %v833, %v808
    %v835 = vsel %vm436, %v834, %v816
    %v836 = vsel %vm438, %v835, %v823
    %v837 = vsel %vm440, %v836, %v832
    %v839 = vrot.slane %v781, 1
    %840 = vrot.lane.b32.xlu0 %v839, 16
    %v841 = vpop.permute.xlu0 %840
    %v843 = vrot.slane %v781, 2
    %844 = vrot.lane.b32.xlu0 %v843, 32
    %v845 = vpop.permute.xlu0 %844
    %v847 = vrot.slane %v781, 3
    %848 = vrot.lane.b32.xlu0 %v847, 48
    %v849 = vpop.permute.xlu0 %848
    %v851 = vrot.slane %v781, 4
    %852 = vrot.lane.b32.xlu0 %v851, 64
    %v853 = vpop.permute.xlu0 %852
    %v855 = vrot.slane %v781, 5
    %856 = vrot.lane.b32.xlu0 %v855, 80
    %v857 = vpop.permute.xlu0 %856
    %v859 = vsel %vm590, %v781, %v841
    %vm860 = vcmask 261120
    %v861 = vsel %vm860, %v859, %v845
    %vm862 = vcmask 392192
    %v863 = vsel %vm862, %v861, %v849
    %vm864 = vcmask 523264
    %v865 = vsel %vm864, %v863, %v853
    %vm866 = vcmask 654336
    %v867 = vsel %vm866, %v865, %v857
    %v869 = vrot.slane %v837, 1
    %870 = vrot.lane.b32.xlu0 %v869, 16
    %v871 = vpop.permute.xlu0 %870
    %v873 = vrot.slane %v837, 2
    %874 = vrot.lane.b32.xlu0 %v873, 32
    %v875 = vpop.permute.xlu0 %874
    %v877 = vrot.slane %v837, 3
    %878 = vrot.lane.b32.xlu0 %v877, 48
    %v879 = vpop.permute.xlu0 %878
    %v881 = vrot.slane %v837, 4
    %882 = vrot.lane.b32.xlu0 %v881, 64
    %v883 = vpop.permute.xlu0 %882
    %v885 = vrot.slane %v837, 5
    %886 = vrot.lane.b32.xlu0 %v885, 80
    %v887 = vpop.permute.xlu0 %886
    %v889 = vsel %vm590, %v837, %v871
    %v890 = vsel %vm860, %v889, %v875
    %v891 = vsel %vm862, %v890, %v879
    %v892 = vsel %vm864, %v891, %v883
    %v893 = vsel %vm866, %v892, %v887
    %v895 = vrot.slane %v893, 7
    %v897 = vsel %vm432, %v867, %v895
    %v898 = vpack.c.bf16 %v897, %v897
    %v899 = vld [vmem:[%s7] sm:$0xff]
    %v900 = vld [vmem:[%s7 + $0x8] sm:$0xff]
    %v901 = vld [vmem:[%s7 + $0x10] sm:$0xff]
    %v902 = vld [vmem:[%s7 + $0x18] sm:$0xff]
    %v903 = vld [vmem:[%s7 + $0x20] sm:$0xff]
    %v904 = vld [vmem:[%s7 + $0x28] sm:$0xff]
    %v905 = vld [vmem:[%s7 + $0x30] sm:$0xff]
    %v906 = vld [vmem:[%s7 + $0x38] sm:$0xff]
    %v907 = vld [vmem:[%s7 + $0x40] sm:$0xff]
    %v908 = vld [vmem:[%s7 + $0x48] sm:$0xff]
    %v909 = vld [vmem:[%s7 + $0x50] sm:$0xff]
    %v910 = vld [vmem:[%s7 + $0x58] sm:$0xff]
    %v911 = vpack.c.bf16 %v900, %v899
    %v912 = vpack.c.bf16 %v902, %v901
    %v913 = vpack.c.bf16 %v904, %v903
    %v914 = vpack.c.bf16 %v906, %v905
    %v915 = vpack.c.bf16 %v908, %v907
    %v916 = vpack.c.bf16 %v910, %v909
    %v917 = vld [vmem:[%s8] sm:$0x1]
    %v919 = vperm.slane %v917, 0
    %vm921 = vcmask 785408
    %v923 = vsel %vm921, %v898, 0
    %925 = vmatpush.bf16.msra.mxu0 0
    %926 = vmatpush.bf16.msra.mxu0 0
    %927 = vmatpush.bf16.msra.mxu0 %v916
    %928 = vmatpush.bf16.msra.mxu0 %v915
    %929 = vmatpush.bf16.msra.mxu0 %v914
    %930 = vmatpush.bf16.msra.mxu0 %v913
    %931 = vmatpush.bf16.msra.mxu0 %v912
    %932 = vmatpush.bf16.msra.mxu0 %v911
    %933 = vmatmul.bf16.gmra.mxu0 %v923
    %v934 = vpop.f32.mrf.mxu0
    %v935 = vadd.f32 %v919, %v934
    %v936 = vpop.f32.mrf.mxu0
    %937 = vdwg.mxu0
    %v938 = vmax.f32 %v935, 0.0
    %v939 = vpack.c.bf16 %v938, %v938
    %v940 = vld [vmem:[%s9] sm:$0xff]
    %v941 = vld [vmem:[%s9 + $0x8] sm:$0xff]
    %v942 = vld [vmem:[%s9 + $0x10] sm:$0xff]
    %v943 = vld [vmem:[%s9 + $0x18] sm:$0xff]
    %v944 = vpack.c.bf16 %v941, %v940
    %v945 = vpack.c.bf16 %v943, %v942
    %v946 = vld [vmem:[%s10] sm:$0x1]
    %v948 = vperm.slane %v946, 0
    %v951 = vsel %vm860, %v939, 0
    %953 = vmatpush.bf16.msra.mxu0 0
    %954 = vmatpush.bf16.msra.mxu0 0
    %955 = vmatpush.bf16.msra.mxu0 0
    %956 = vmatpush.bf16.msra.mxu0 0
    %957 = vmatpush.bf16.msra.mxu0 0
    %958 = vmatpush.bf16.msra.mxu0 0
    %959 = vmatpush.bf16.msra.mxu0 %v945
    %960 = vmatpush.bf16.msra.mxu0 %v944
    %961 = vmatmul.bf16.gmra.mxu0 %v951
    %v962 = vpop.f32.mrf.mxu0
    %v963 = vadd.f32 %v948, %v962
    %v964 = vpop.f32.mrf.mxu0
    %965 = vdwg.mxu0
    %v966 = vsub.f32 0.0, %v963
    %v967 = vmul.f32 %v966, 1.442695
    %v968 = vpow.pop %v967
    %v969 = vadd.f32 %v968, 1.0
    %v970 = vrcp.pop %v969
    %v971 = vmul.f32 %v969, %v970
    %v972 = vsub.f32 1.0, %v971
    %v973 = vmul.f32 %v970, %v972
    %v974 = vadd.f32 %v970, %v973
    %vm975 = vweird.f32 %v969
    %vm976 = vweird.f32 %v970
    %vm977 = vmor %vm975, %vm976
    %v978 = vsel %vm977, %v970, %v974
    %v979 = vand.u32 2147483647, %v969
    %vm980 = vcmp.eq.f32.partialorder %v979, 8.507059e+37
    %v981 = vand.u32 %v969, 2147483648
    %v982 = vor.u32 1.1754944e-38, %v981
    %v983 = vsel %vm980, %v982, %v978
    %v984 = vmul.f32 1.0, %v983
    %vm985 = vcmask 17408
    %986 = vst.msk [vmem:[#allocation2] sm:$0x3] %vm985, %v984
    // Predicated region
    $region46: #{tpu_custom_call.1} parent=1 // pred_check
      _
    $region47: #{tpu_custom_call.1} parent=1 // pred_check_branch
      %988 = sbr.rel (0) target = $region49
    $region48: #{tpu_custom_call.1} parent=1 // pred_region
      %990 = vsyncadd [#allocation3], 0
      %s992 = sshll.u32 [#allocation2], 4
      %s993 = int_to_ptr.vmem [resolvable:$true] %s992
      %s994 = sshll.u32 %s11, 4
      %s995 = int_to_ptr.hbm [resolvable:$true] %s994
      %997 = dma.vmem_to_hbm [thread:$0]  %s993, 32, %s995, [#allocation3]
    $region49: #{tpu_custom_call.1} parent=1 // pred_fallthru
      _
    // Predicated region
    $region50: #{tpu_custom_call.1} parent=1 // pred_check
      _
    $region51: #{tpu_custom_call.1} parent=1 // pred_check_branch
      %999 = sbr.rel (0) target = $region53
    $region52: #{tpu_custom_call.1} parent=1 // pred_region
      %1001 = dma.done [#allocation3], 32
    $region53: #{tpu_custom_call.1} parent=1 // pred_fallthru
      _
    %1002 = vsyncpa [#allocation3], 1

</llo_original>
